<compile_context>
chip_gen: v5e
topology: v5e:2x2
jax: 0.10.0
libtpu: 0.0.40
codegen_flags: <defaults>
</compile_context>

<pallas_src>
import functools
import math

import jax
import jax.numpy as jnp
from jax import lax
from jax.experimental import pallas as pl
from jax.experimental.pallas import tpu as pltpu


def _round_up(x, m):
    return ((x + m - 1) // m) * m


def _cdiv(a, b):
    return -(-a // b)


@functools.lru_cache(maxsize=None)
def _vmem_cap_bytes():
    """Physical VMEM per TensorCore (64 MiB on v7x, 128 MiB on v5e/v6e)."""
    try:
        info = pltpu.get_tpu_info()
        cap = int(getattr(info, "vmem_capacity_bytes", 0))
        if cap > 0:
            return cap
    except Exception:
        pass
    return 64 << 20  # conservative fallback = smallest generation (v7x per-TC)


def _vmem_budget_bytes():
    # Leave headroom for Mosaic internal scratch / semaphores / misc.
    return max((_vmem_cap_bytes() * 9) // 10 - (8 << 20), 24 << 20)


def _compiler_params(est_bytes, semantics):
    cap = _vmem_cap_bytes()
    limit = max(int(est_bytes) + (16 << 20), 32 << 20)
    limit = min(limit, (cap * 9) // 10)
    return pltpu.CompilerParams(dimension_semantics=semantics,
                                vmem_limit_bytes=limit)


def _block_spec(shape, index_map, buffer_count=None):
    """BlockSpec with an optional explicit buffer count (graceful fallback if
    the pipeline_mode kwarg is unavailable in this JAX version)."""
    if buffer_count is not None:
        try:
            return pl.BlockSpec(shape, index_map,
                                pipeline_mode=pl.Buffered(buffer_count))
        except (TypeError, AttributeError):
            pass
    return pl.BlockSpec(shape, index_map)


# ----------------------------- kernels --------------------------------------


def _matmul_act_kernel(mode, neg_slope, a_ref, w_ref, o_ref, acc_ref):
    """K-tiled im2col-matmul fused with LeakyReLU or Sigmoid epilogue."""
    @pl.when(pl.program_id(1) == 0)
    def _():
        acc_ref[...] = jnp.zeros_like(acc_ref)

    acc_ref[...] += jnp.dot(a_ref[...], w_ref[...],
                            preferred_element_type=jnp.float32)

    @pl.when(pl.program_id(1) == pl.num_programs(1) - 1)
    def _():
        acc = acc_ref[...]
        if mode == "lrelu":
            acc = jnp.where(acc >= 0, acc, neg_slope * acc)
        elif mode == "sigmoid":
            # exp -> EUP, approximate reciprocal -> EUP; no VPU divide.
            acc = pl.reciprocal(1.0 + jnp.exp(-acc), approx=True)
        o_ref[...] = acc.astype(o_ref.dtype)


def _matmul_bn_lrelu_fused_kernel(m_valid, neg_slope, eps,
                                  a_ref, w_ref, g_ref, b_ref, o_ref, acc_ref):
    """Single-M-tile path: K-tiled matmul + training-mode BN + LeakyReLU.

    Padded rows of A are zero, so acc there is zero: the mean is unaffected
    (divide by m_valid) and each pad row adds exactly mean^2 to the centered
    sum of squares, which is subtracted back out.  Padded output channels have
    gamma == 0, so scale/bias collapse to 0 there.
    """
    @pl.when(pl.program_id(1) == 0)
    def _():
        acc_ref[...] = jnp.zeros_like(acc_ref)

    acc_ref[...] += jnp.dot(a_ref[...], w_ref[...],
                            preferred_element_type=jnp.float32)

    @pl.when(pl.program_id(1) == pl.num_programs(1) - 1)
    def _():
        acc = acc_ref[...]
        inv_cnt = jnp.float32(1.0 / m_valid)
        mean = jnp.sum(acc, axis=0, keepdims=True) * inv_cnt
        centered = acc - mean
        ssq = jnp.sum(centered * centered, axis=0, keepdims=True)
        pad_rows = acc.shape[0] - m_valid
        if pad_rows:
            ssq = ssq - jnp.float32(pad_rows) * mean * mean
        var = jnp.maximum(ssq * inv_cnt, 0.0)
        scale = g_ref[...] * lax.rsqrt(var + eps)   # (1, N)
        bias = b_ref[...] - mean * scale            # (1, N)
        acc = acc * scale + bias                    # one FMA per element
        acc = jnp.where(acc >= 0, acc, neg_slope * acc)
        o_ref[...] = acc.astype(o_ref.dtype)


def _matmul_stats_kernel(a_ref, w_ref, y_ref, stats_ref, acc_ref):
    """Multi-M-tile BN pass 1: K-tiled matmul + per-tile partial sums."""
    @pl.when(pl.program_id(1) == 0)
    def _():
        acc_ref[...] = jnp.zeros_like(acc_ref)

    acc_ref[...] += jnp.dot(a_ref[...], w_ref[...],
                            preferred_element_type=jnp.float32)

    @pl.when(pl.program_id(1) == pl.num_programs(1) - 1)
    def _():
        acc = acc_ref[...]
        y_ref[...] = acc.astype(y_ref.dtype)
        n = acc.shape[1]
        s1 = jnp.sum(acc, axis=0, keepdims=True)
        s2 = jnp.sum(acc * acc, axis=0, keepdims=True)
        stats_ref[...] = jnp.concatenate(
            [s1, s2, jnp.zeros((6, n), jnp.float32)], axis=0)


def _affine_lrelu_kernel(neg_slope, y_ref, s_ref, b_ref, o_ref):
    """Multi-M-tile BN pass 2: y*scale + bias, then LeakyReLU (f32 epilogue)."""
    y = y_ref[...].astype(jnp.float32)
    y = y * s_ref[...] + b_ref[...]
    o_ref[...] = jnp.where(y >= 0, y, neg_slope * y).astype(o_ref.dtype)


# --------------------------- layer wrapper -----------------------------------


def _pick_block_k(kp, max_block_k):
    max_block_k = max(128, _round_up(min(max_block_k, kp), 128))
    if kp <= max_block_k:
        return kp
    for cand in range(max_block_k, 127, -128):
        if kp % cand == 0:
            return cand
    return 128


def _estimate_vmem(block_m, block_k, np_, out_isz, grid_k, split_bn):
    a_bytes = 2 * block_m * block_k * 2                      # bf16 A, double-buffered
    w_bytes = (1 if grid_k == 1 else 2) * block_k * np_ * 2  # bf16 W slab / stream
    o_bytes = 2 * block_m * np_ * out_isz                    # output blocks
    acc_bytes = block_m * np_ * 4                            # f32 accumulator scratch
    tmp_bytes = 2 * block_m * np_ * 4                        # f32 epilogue temporaries
    vec_bytes = 8 * np_ * 4                                  # gamma/beta/scale/bias
    stats_bytes = (2 * 8 * np_ * 4) if split_bn else 0
    return a_bytes + w_bytes + o_bytes + acc_bytes + tmp_bytes + vec_bytes + stats_bytes


def fused_conv_layer(patches, w_mat, mode, gamma=None, beta=None,
                     neg_slope=0.2, eps=1e-5, max_block_m=1024,
                     max_block_k=2048, out_dtype=jnp.bfloat16):
    """patches: (M, K) im2col rows, w_mat: (K, N).  Returns (M, N) out_dtype."""
    m, k = patches.shape
    k2, n = w_mat.shape
    assert k == k2

    kp = _round_up(k, 128)
    np_ = _round_up(n, 128)
    out_isz = jnp.dtype(out_dtype).itemsize

    block_k = _pick_block_k(kp, max_block_k)
    grid_k = kp // block_k

    # Balanced M tiling: split M into nb roughly equal 16-row-aligned tiles so
    # the last tile isn't mostly zero padding; add tiles until the per-step
    # working set (incl. f32 scratch/temps) fits the VMEM budget.
    budget = _vmem_budget_bytes()
    nb = max(1, _cdiv(m, max(16, max_block_m)))
    while True:
        block_m = _round_up(_cdiv(m, nb), 16)
        est = _estimate_vmem(block_m, block_k, np_, out_isz, grid_k,
                             mode == "bn_lrelu")
        if est <= budget or block_m <= 256:
            break
        nb += 1
    grid_m = nb
    mp = grid_m * block_m

    a_p = patches.astype(jnp.bfloat16)
    if mp != m or kp != k:
        a_p = jnp.pad(a_p, ((0, mp - m), (0, kp - k)))
    w_p = w_mat.astype(jnp.bfloat16)
    if kp != k or np_ != n:
        w_p = jnp.pad(w_p, ((0, kp - k), (0, np_ - n)))

    a_spec = pl.BlockSpec((block_m, block_k), lambda i, kk: (i, kk))
    # The weight slab is grid-invariant when grid_k == 1: single-buffer it so
    # it doesn't reserve a second multi-MiB VMEM buffer.
    w_spec = _block_spec((block_k, np_), lambda i, kk: (kk, 0),
                         buffer_count=1 if grid_k == 1 else None)
    vec_spec = _block_spec((1, np_), lambda i, kk: (0, 0), buffer_count=1)
    o_spec = pl.BlockSpec((block_m, np_), lambda i, kk: (i, 0))

    acc_scratch = pltpu.VMEM((block_m, np_), jnp.float32)
    sem2d = ("parallel", "arbitrary")

    if mode in ("lrelu", "sigmoid"):
        out = pl.pallas_call(
            functools.partial(_matmul_act_kernel, mode, neg_slope),
            grid=(grid_m, grid_k),
            out_shape=jax.ShapeDtypeStruct((mp, np_), out_dtype),
            in_specs=[a_spec, w_spec],
            out_specs=o_spec,
            scratch_shapes=[acc_scratch],
            compiler_params=_compiler_params(est, sem2d),
        )(a_p, w_p)
        return out[:m, :n]

    # ---- bn_lrelu ----
    g_p = jnp.pad(gamma.astype(jnp.float32).reshape(1, n), ((0, 0), (0, np_ - n)))
    b_p = jnp.pad(beta.astype(jnp.float32).reshape(1, n), ((0, 0), (0, np_ - n)))

    if grid_m == 1:
        # Whole batch fits in one M tile -> fully fused matmul + BN + LeakyReLU.
        out = pl.pallas_call(
            functools.partial(_matmul_bn_lrelu_fused_kernel, m, neg_slope, eps),
            grid=(grid_m, grid_k),
            out_shape=jax.ShapeDtypeStruct((mp, np_), out_dtype),
            in_specs=[a_spec, w_spec, vec_spec, vec_spec],
            out_specs=o_spec,
            scratch_shapes=[acc_scratch],
            compiler_params=_compiler_params(est, sem2d),
        )(a_p, w_p, g_p, b_p)
        return out[:m, :n]

    # Multi-tile: two-kernel split so BN statistics are global, not per-tile.
    # Pass 1: tiled matmul + per-tile partial sums (padded zero rows contribute
    # nothing, so no mask is needed).
    y, stats = pl.pallas_call(
        _matmul_stats_kernel,
        grid=(grid_m, grid_k),
        out_shape=(jax.ShapeDtypeStruct((mp, np_), jnp.bfloat16),
                   jax.ShapeDtypeStruct((grid_m * 8, np_), jnp.float32)),
        in_specs=[a_spec, w_spec],
        out_specs=(o_spec, pl.BlockSpec((8, np_), lambda i, kk: (i, 0))),
        scratch_shapes=[acc_scratch],
        compiler_params=_compiler_params(est, sem2d),
    )(a_p, w_p)

    stats = stats.reshape(grid_m, 8, np_)
    sum1 = jnp.sum(stats[:, 0, :], axis=0)
    sum2 = jnp.sum(stats[:, 1, :], axis=0)
    mean = sum1 / m
    var = jnp.maximum(sum2 / m - mean * mean, 0.0)
    scale = (g_p * lax.rsqrt(var + eps)).astype(jnp.float32)   # (1, Np)
    bias = (b_p - mean * scale).astype(jnp.float32)            # (1, Np)

    # Pass 2: tiled folded-affine + LeakyReLU; y is aliased into the output so
    # its HBM buffer is reused in place.
    y_spec = pl.BlockSpec((block_m, np_), lambda i: (i, 0))
    vec_spec1d = _block_spec((1, np_), lambda i: (0, 0), buffer_count=1)
    est2 = (2 * block_m * np_ * 2 + 2 * block_m * np_ * out_isz
            + 2 * block_m * np_ * 4 + 8 * np_ * 4)
    alias = {0: 0} if jnp.dtype(out_dtype) == jnp.dtype(jnp.bfloat16) else {}
    out = pl.pallas_call(
        functools.partial(_affine_lrelu_kernel, neg_slope),
        grid=(grid_m,),
        out_shape=jax.ShapeDtypeStruct((mp, np_), out_dtype),
        in_specs=[y_spec, vec_spec1d, vec_spec1d],
        out_specs=y_spec,
        input_output_aliases=alias,
        compiler_params=_compiler_params(est2, ("parallel",)),
    )(y, scale, bias)
    return out[:m, :n]


# --------------------------- model glue --------------------------------------


def _im2col(x_nhwc, kh, kw, stride, padding):
    n, h, w, c = x_nhwc.shape
    xp = jnp.pad(x_nhwc, ((0, 0), (padding, padding), (padding, padding), (0, 0)))
    ho = (h + 2 * padding - kh) // stride + 1
    wo = (w + 2 * padding - kw) // stride + 1
    cols = []
    for i in range(kh):
        for j in range(kw):
            cols.append(xp[:, i:i + stride * ho:stride, j:j + stride * wo:stride, :])
    patches = jnp.stack(cols, axis=3)               # (n, ho, wo, kh*kw, c)
    return patches.reshape(n * ho * wo, kh * kw * c), (n, ho, wo)


def _conv_weight_to_mat(w_oihw, cin_padded):
    o, i, kh, kw = w_oihw.shape
    if cin_padded != i:
        w_oihw = jnp.pad(w_oihw, ((0, 0), (0, cin_padded - i), (0, 0), (0, 0)))
    # (kh, kw, Cin, O) flatten -> matches patch flatten order (kh*kw major, Cin minor)
    return jnp.transpose(w_oihw, (2, 3, 1, 0)).reshape(kh * kw * cin_padded, o)


def init_discriminator_params(key, image_size, feature_map_multiplier):
    """Deterministic synthetic weights mirroring Discriminator.__init__ shapes."""
    assert image_size % 16 == 0, "Image size must be a multiple of 16"
    num_downsamples = int(math.log2(image_size)) - 3
    params, cfgs = [], []
    in_ch, out_ch = 3, feature_map_multiplier
    key, sub = jax.random.split(key)
    params.append(dict(w=0.1 * jax.random.normal(sub, (out_ch, in_ch, 4, 4), jnp.float32)))
    cfgs.append(("lrelu", 2, 1))
    in_ch = out_ch
    for _ in range(1, num_downsamples):
        out_ch *= 2
        key, sub = jax.random.split(key)
        params.append(dict(
            w=0.1 * jax.random.normal(sub, (out_ch, in_ch, 4, 4), jnp.float32),
            gamma=jnp.ones((out_ch,), jnp.float32),   # BatchNorm2d default init
            beta=jnp.zeros((out_ch,), jnp.float32)))
        cfgs.append(("bn_lrelu", 2, 1))
        in_ch = out_ch
    key, sub = jax.random.split(key)
    params.append(dict(w=0.1 * jax.random.normal(sub, (1, in_ch, 4, 4), jnp.float32)))
    cfgs.append(("sigmoid", 1, 0))
    return params, tuple(cfgs)


def discriminator_forward(x_nchw, params, *, cfgs, max_block_m=1024,
                          max_block_k=2048):
    x = jnp.transpose(x_nchw, (0, 2, 3, 1)).astype(jnp.bfloat16)  # NCHW -> NHWC
    for layer, (ltype, stride, padding) in zip(params, cfgs):
        w = layer["w"]
        kh, kw = w.shape[2], w.shape[3]
        c = x.shape[-1]
        cp = _round_up(c, 8)   # 4x4 kernels: K = 16*cp is a multiple of 128,
        if cp != c:            # so no post-im2col column pad pass is needed.
            x = jnp.pad(x, ((0, 0), (0, 0), (0, 0), (0, cp - c)))
        patches, (n, ho, wo) = _im2col(x, kh, kw, stride, padding)
        out_dtype = jnp.float32 if ltype == "sigmoid" else jnp.bfloat16
        y = fused_conv_layer(patches, _conv_weight_to_mat(w, cp), ltype,
                             gamma=layer.get("gamma"), beta=layer.get("beta"),
                             max_block_m=max_block_m, max_block_k=max_block_k,
                             out_dtype=out_dtype)
        x = y.reshape(n, ho, wo, w.shape[0])
    # final conv has 1 output channel; PyTorch does (N,1,H,W).view(-1,1).
    n, ho, wo, _ = x.shape
    return x.reshape(n * ho * wo, 1).astype(jnp.float32)


def reference_forward(x_nchw, params, cfgs, eps=1e-5, neg=0.2):
    """Plain-JAX f32 reference (matches PyTorch forward in training mode)."""
    y = x_nchw
    for layer, (t, s, p) in zip(params, cfgs):
        y = lax.conv_general_dilated(y, layer["w"], (s, s), [(p, p), (p, p)],
                                     dimension_numbers=("NCHW", "OIHW", "NCHW"))
        if t == "bn_lrelu":
            mean = jnp.mean(y, axis=(0, 2, 3), keepdims=True)
            var = jnp.mean((y - mean) ** 2, axis=(0, 2, 3), keepdims=True)
            y = (y - mean) * lax.rsqrt(var + eps)
            y = y * layer["gamma"].reshape(1, -1, 1, 1) + layer["beta"].reshape(1, -1, 1, 1)
        if t in ("lrelu", "bn_lrelu"):
            y = jnp.where(y >= 0, y, neg * y)
        elif t == "sigmoid":
            y = jax.nn.sigmoid(y)
    return y.reshape(-1, 1)


if __name__ == "__main__":
    image_size = 32            # multiple of 16 -> 2 downsamples (one BN layer)
    batch = 2
    feature_map_multiplier = 8  # small synthetic width (default in module is 64)

    key = jax.random.PRNGKey(0)
    kx, kp_ = jax.random.split(key)
    x = jax.random.normal(kx, (batch, 3, image_size, image_size), jnp.float32)
    params, cfgs = init_discriminator_params(kp_, image_size, feature_map_multiplier)

    fwd = jax.jit(discriminator_forward,
                  static_argnames=("cfgs", "max_block_m", "max_block_k"))

    ref = jax.block_until_ready(reference_forward(x, params, cfgs))

    # Path 1: default tiling (single M tile at this size -> fully fused BN).
    out1 = jax.block_until_ready(fwd(x, params, cfgs=cfgs))
    # Path 2: force multi-tile M grid and a small K tile -> exercises the
    # split-BN (global stats) path and the K-accumulator grid axis.
    out2 = jax.block_until_ready(
        fwd(x, params, cfgs=cfgs, max_block_m=64, max_block_k=128))

    expected_rows = batch * ((image_size // 4) - 3) ** 2  # (2 * 5 * 5, 1) = (50, 1)
    assert out1.shape == (expected_rows, 1), out1.shape
    assert out2.shape == (expected_rows, 1), out2.shape
    assert ref.shape == out1.shape
    for name, out in (("fused", out1), ("tiled", out2)):
        max_err = float(jnp.max(jnp.abs(out - ref)))
        # bf16 matmul operands / activations -> looser tolerance than pure f32.
        assert max_err < 5e-2, f"{name} mismatch vs reference: max abs err = {max_err}"

    print("KERNEL_OK")
</pallas_src>

<mosaic_0001>
module attributes {stable_mosaic.version = 11 : i64} {
  func.func @_matmul_act_kernel(%arg0: i32, %arg1: i32, %arg2: memref<512x128xbf16, #tpu.memory_space<vmem>>, %arg3: memref<128x128xbf16, #tpu.memory_space<vmem>>, %arg4: memref<512x128xbf16, #tpu.memory_space<vmem>>, %arg5: memref<512x128xf32, #tpu.memory_space<vmem>>) attributes {dimension_semantics = [#tpu.dimension_semantics<parallel>, #tpu.dimension_semantics<arbitrary>], iteration_bounds = array<i64: 1, 1>, scalar_prefetch = 0 : i64, scratch_operands = 1 : i64, tpu.core_type = #tpu.core_type<tc>, window_params = [{transform_indices = @transform_0, window_bounds = array<i64: 512, 128>}, {pipeline_mode = #tpu.pipeline_mode<synchronous>, transform_indices = @transform_1, window_bounds = array<i64: 128, 128>}, {transform_indices = @transform_2, window_bounds = array<i64: 512, 128>}]} {
    %c0_i32 = arith.constant 0 : i32
    %0 = arith.cmpi eq, %arg1, %c0_i32 : i32
    %1 = arith.extui %0 : i1 to i32
    %c0_i32_0 = arith.constant 0 : i32
    %2 = arith.cmpi ne, %1, %c0_i32_0 : i32
    scf.if %2 {
      %cst_10 = arith.constant 0.000000e+00 : f32
      %12 = vector.broadcast %cst_10 : f32 to vector<512x128xf32>
      %c0_11 = arith.constant 0 : index
      %c0_12 = arith.constant 0 : index
      %13 = vector.load %arg5[%c0_11, %c0_12] : memref<512x128xf32, #tpu.memory_space<vmem>>, vector<512x128xf32>
      tpu.vector_store %arg5[%c0_11, %c0_12], %12 {strides = array<i32>} : memref<512x128xf32, #tpu.memory_space<vmem>>, vector<512x128xf32>,
    } else {
    }
    %c0 = arith.constant 0 : index
    %c0_1 = arith.constant 0 : index
    %3 = vector.load %arg5[%c0, %c0_1] : memref<512x128xf32, #tpu.memory_space<vmem>>, vector<512x128xf32>
    %c0_2 = arith.constant 0 : index
    %c0_3 = arith.constant 0 : index
    %4 = vector.load %arg2[%c0_2, %c0_3] : memref<512x128xbf16, #tpu.memory_space<vmem>>, vector<512x128xbf16>
    %c0_4 = arith.constant 0 : index
    %c0_5 = arith.constant 0 : index
    %5 = vector.load %arg3[%c0_4, %c0_5] : memref<128x128xbf16, #tpu.memory_space<vmem>>, vector<128x128xbf16>
    %cst = arith.constant dense<0.000000e+00> : vector<512x128xf32>
    %6 = tpu.matmul %4, %5, %cst {dimension_numbers = #tpu.dot_dimension_numbers<[1], [0], [0], [1], [0, 0, 1, 1], [], []>} : vector<512x128xbf16>, vector<128x128xbf16>, vector<512x128xf32> -> vector<512x128xf32>
    %7 = arith.addf %3, %6 : vector<512x128xf32>
    %c0_6 = arith.constant 0 : index
    %c0_7 = arith.constant 0 : index
    %8 = vector.load %arg5[%c0_6, %c0_7] : memref<512x128xf32, #tpu.memory_space<vmem>>, vector<512x128xf32>
    tpu.vector_store %arg5[%c0_6, %c0_7], %7 {strides = array<i32>} : memref<512x128xf32, #tpu.memory_space<vmem>>, vector<512x128xf32>,
    %c0_i32_8 = arith.constant 0 : i32
    %9 = arith.cmpi eq, %arg1, %c0_i32_8 : i32
    %10 = arith.extui %9 : i1 to i32
    %c0_i32_9 = arith.constant 0 : i32
    %11 = arith.cmpi ne, %10, %c0_i32_9 : i32
    scf.if %11 {
      %c0_10 = arith.constant 0 : index
      %c0_11 = arith.constant 0 : index
      %12 = vector.load %arg5[%c0_10, %c0_11] : memref<512x128xf32, #tpu.memory_space<vmem>>, vector<512x128xf32>
      %cst_12 = arith.constant 0.000000e+00 : f32
      %13 = vector.broadcast %cst_12 : f32 to vector<512x128xf32>
      %14 = arith.cmpf oge, %12, %13 : vector<512x128xf32>
      %cst_13 = arith.constant 2.000000e-01 : f32
      %15 = vector.broadcast %cst_13 : f32 to vector<512x128xf32>
      %16 = arith.mulf %15, %12 : vector<512x128xf32>
      %17 = arith.select %14, %12, %16 : vector<512x128xi1>, vector<512x128xf32>
      %18 = arith.truncf %17 : vector<512x128xf32> to vector<512x128xbf16>
      %c0_14 = arith.constant 0 : index
      %c0_15 = arith.constant 0 : index
      %19 = vector.load %arg4[%c0_14, %c0_15] : memref<512x128xbf16, #tpu.memory_space<vmem>>, vector<512x128xbf16>
      tpu.vector_store %arg4[%c0_14, %c0_15], %18 {strides = array<i32>} : memref<512x128xbf16, #tpu.memory_space<vmem>>, vector<512x128xbf16>,
    } else {
    }
    return
  }
  func.func @transform_0(%arg0: i32, %arg1: i32) -> (i32, i32) {
    %c0_i32 = arith.constant 0 : i32
    return %arg0, %arg1 : i32, i32
  }
  func.func @transform_1(%arg0: i32, %arg1: i32) -> (i32, i32) {
    %c0_i32 = arith.constant 0 : i32
    %c0_i32_0 = arith.constant 0 : i32
    return %arg1, %c0_i32 : i32, i32
  }
  func.func @transform_2(%arg0: i32, %arg1: i32) -> (i32, i32) {
    %c0_i32 = arith.constant 0 : i32
    %c0_i32_0 = arith.constant 0 : i32
    return %arg0, %c0_i32 : i32, i32
  }
}

module attributes {stable_mosaic.version = 11 : i64} {
  func.func @_matmul_bn_lrelu_fused_kernel(%arg0: i32, %arg1: i32, %arg2: memref<128x128xbf16, #tpu.memory_space<vmem>>, %arg3: memref<128x128xbf16, #tpu.memory_space<vmem>>, %arg4: memref<1x128xf32, #tpu.memory_space<vmem>>, %arg5: memref<1x128xf32, #tpu.memory_space<vmem>>, %arg6: memref<128x128xbf16, #tpu.memory_space<vmem>>, %arg7: memref<128x128xf32, #tpu.memory_space<vmem>>) attributes {dimension_semantics = [#tpu.dimension_semantics<parallel>, #tpu.dimension_semantics<arbitrary>], iteration_bounds = array<i64: 1, 1>, scalar_prefetch = 0 : i64, scratch_operands = 1 : i64, tpu.core_type = #tpu.core_type<tc>, window_params = [{transform_indices = @transform_0, window_bounds = array<i64: 128, 128>}, {pipeline_mode = #tpu.pipeline_mode<synchronous>, transform_indices = @transform_1, window_bounds = array<i64: 128, 128>}, {pipeline_mode = #tpu.pipeline_mode<synchronous>, transform_indices = @transform_2, window_bounds = array<i64: 1, 128>}, {pipeline_mode = #tpu.pipeline_mode<synchronous>, transform_indices = @transform_3, window_bounds = array<i64: 1, 128>}, {transform_indices = @transform_4, window_bounds = array<i64: 128, 128>}]} {
    %c0_i32 = arith.constant 0 : i32
    %0 = arith.cmpi eq, %arg1, %c0_i32 : i32
    %1 = arith.extui %0 : i1 to i32
    %c0_i32_0 = arith.constant 0 : i32
    %2 = arith.cmpi ne, %1, %c0_i32_0 : i32
    scf.if %2 {
      %cst_10 = arith.constant 0.000000e+00 : f32
      %12 = vector.broadcast %cst_10 : f32 to vector<128x128xf32>
      %c0_11 = arith.constant 0 : index
      %c0_12 = arith.constant 0 : index
      %13 = vector.load %arg7[%c0_11, %c0_12] : memref<128x128xf32, #tpu.memory_space<vmem>>, vector<128x128xf32>
      tpu.vector_store %arg7[%c0_11, %c0_12], %12 {strides = array<i32>} : memref<128x128xf32, #tpu.memory_space<vmem>>, vector<128x128xf32>,
    } else {
    }
    %c0 = arith.constant 0 : index
    %c0_1 = arith.constant 0 : index
    %3 = vector.load %arg7[%c0, %c0_1] : memref<128x128xf32, #tpu.memory_space<vmem>>, vector<128x128xf32>
    %c0_2 = arith.constant 0 : index
    %c0_3 = arith.constant 0 : index
    %4 = vector.load %arg2[%c0_2, %c0_3] : memref<128x128xbf16, #tpu.memory_space<vmem>>, vector<128x128xbf16>
    %c0_4 = arith.constant 0 : index
    %c0_5 = arith.constant 0 : index
    %5 = vector.load %arg3[%c0_4, %c0_5] : memref<128x128xbf16, #tpu.memory_space<vmem>>, vector<128x128xbf16>
    %cst = arith.constant dense<0.000000e+00> : vector<128x128xf32>
    %6 = tpu.matmul %4, %5, %cst {dimension_numbers = #tpu.dot_dimension_numbers<[1], [0], [0], [1], [0, 0, 1, 1], [], []>} : vector<128x128xbf16>, vector<128x128xbf16>, vector<128x128xf32> -> vector<128x128xf32>
    %7 = arith.addf %3, %6 : vector<128x128xf32>
    %c0_6 = arith.constant 0 : index
    %c0_7 = arith.constant 0 : index
    %8 = vector.load %arg7[%c0_6, %c0_7] : memref<128x128xf32, #tpu.memory_space<vmem>>, vector<128x128xf32>
    tpu.vector_store %arg7[%c0_6, %c0_7], %7 {strides = array<i32>} : memref<128x128xf32, #tpu.memory_space<vmem>>, vector<128x128xf32>,
    %c0_i32_8 = arith.constant 0 : i32
    %9 = arith.cmpi eq, %arg1, %c0_i32_8 : i32
    %10 = arith.extui %9 : i1 to i32
    %c0_i32_9 = arith.constant 0 : i32
    %11 = arith.cmpi ne, %10, %c0_i32_9 : i32
    scf.if %11 {
      %c0_10 = arith.constant 0 : index
      %c0_11 = arith.constant 0 : index
      %12 = vector.load %arg7[%c0_10, %c0_11] : memref<128x128xf32, #tpu.memory_space<vmem>>, vector<128x128xf32>
      %cst_12 = arith.constant dense<0.000000e+00> : vector<128xf32>
      %13 = vector.multi_reduction <add>, %12, %cst_12 [0] : vector<128x128xf32> to vector<128xf32>
      %14 = vector.shape_cast %13 : vector<128xf32> to vector<1x128xf32>
      %cst_13 = arith.constant 7.812500e-03 : f32
      %15 = vector.broadcast %cst_13 : f32 to vector<1x128xf32>
      %16 = arith.mulf %14, %15 : vector<1x128xf32>
      %17 = vector.broadcast %16 : vector<1x128xf32> to vector<128x128xf32>
      %18 = arith.subf %12, %17 : vector<128x128xf32>
      %19 = arith.mulf %18, %18 : vector<128x128xf32>
      %cst_14 = arith.constant dense<0.000000e+00> : vector<128xf32>
      %20 = vector.multi_reduction <add>, %19, %cst_14 [0] : vector<128x128xf32> to vector<128xf32>
      %21 = vector.shape_cast %20 : vector<128xf32> to vector<1x128xf32>
      %cst_15 = arith.constant 7.812500e-03 : f32
      %22 = vector.broadcast %cst_15 : f32 to vector<1x128xf32>
      %23 = arith.mulf %21, %22 : vector<1x128xf32>
      %cst_16 = arith.constant 0.000000e+00 : f32
      %24 = vector.broadcast %cst_16 : f32 to vector<1x128xf32>
      %25 = arith.maximumf %23, %24 : vector<1x128xf32>
      %c0_17 = arith.constant 0 : index
      %c0_18 = arith.constant 0 : index
      %26 = vector.load %arg4[%c0_17, %c0_18] : memref<1x128xf32, #tpu.memory_space<vmem>>, vector<1x128xf32>
      %cst_19 = arith.constant 9.99999974E-6 : f32
      %27 = vector.broadcast %cst_19 : f32 to vector<1x128xf32>
      %28 = arith.addf %25, %27 : vector<1x128xf32>
      %29 = math.rsqrt %28 : vector<1x128xf32>
      %30 = arith.mulf %26, %29 : vector<1x128xf32>
      %c0_20 = arith.constant 0 : index
      %c0_21 = arith.constant 0 : index
      %31 = vector.load %arg5[%c0_20, %c0_21] : memref<1x128xf32, #tpu.memory_space<vmem>>, vector<1x128xf32>
      %32 = arith.mulf %16, %30 : vector<1x128xf32>
      %33 = arith.subf %31, %32 : vector<1x128xf32>
      %34 = vector.broadcast %30 : vector<1x128xf32> to vector<128x128xf32>
      %35 = arith.mulf %12, %34 : vector<128x128xf32>
      %36 = vector.broadcast %33 : vector<1x128xf32> to vector<128x128xf32>
      %37 = arith.addf %35, %36 : vector<128x128xf32>
      %cst_22 = arith.constant 0.000000e+00 : f32
      %38 = vector.broadcast %cst_22 : f32 to vector<128x128xf32>
      %39 = arith.cmpf oge, %37, %38 : vector<128x128xf32>
      %cst_23 = arith.constant 2.000000e-01 : f32
      %40 = vector.broadcast %cst_23 : f32 to vector<128x128xf32>
      %41 = arith.mulf %40, %37 : vector<128x128xf32>
      %42 = arith.select %39, %37, %41 : vector<128x128xi1>, vector<128x128xf32>
      %43 = arith.truncf %42 : vector<128x128xf32> to vector<128x128xbf16>
      %c0_24 = arith.constant 0 : index
      %c0_25 = arith.constant 0 : index
      %44 = vector.load %arg6[%c0_24, %c0_25] : memref<128x128xbf16, #tpu.memory_space<vmem>>, vector<128x128xbf16>
      tpu.vector_store %arg6[%c0_24, %c0_25], %43 {strides = array<i32>} : memref<128x128xbf16, #tpu.memory_space<vmem>>, vector<128x128xbf16>,
    } else {
    }
    return
  }
  func.func @transform_0(%arg0: i32, %arg1: i32) -> (i32, i32) {
    %c0_i32 = arith.constant 0 : i32
    return %arg0, %arg1 : i32, i32
  }
  func.func @transform_1(%arg0: i32, %arg1: i32) -> (i32, i32) {
    %c0_i32 = arith.constant 0 : i32
    %c0_i32_0 = arith.constant 0 : i32
    return %arg1, %c0_i32 : i32, i32
  }
  func.func @transform_2(%arg0: i32, %arg1: i32) -> (i32, i32) {
    %c0_i32 = arith.constant 0 : i32
    %c0_i32_0 = arith.constant 0 : i32
    %c0_i32_1 = arith.constant 0 : i32
    return %c0_i32, %c0_i32_0 : i32, i32
  }
  func.func @transform_3(%arg0: i32, %arg1: i32) -> (i32, i32) {
    %c0_i32 = arith.constant 0 : i32
    %c0_i32_0 = arith.constant 0 : i32
    %c0_i32_1 = arith.constant 0 : i32
    return %c0_i32, %c0_i32_0 : i32, i32
  }
  func.func @transform_4(%arg0: i32, %arg1: i32) -> (i32, i32) {
    %c0_i32 = arith.constant 0 : i32
    %c0_i32_0 = arith.constant 0 : i32
    return %arg0, %c0_i32 : i32, i32
  }
}

module attributes {stable_mosaic.version = 11 : i64} {
  func.func @_matmul_act_kernel(%arg0: i32, %arg1: i32, %arg2: memref<64x256xbf16, #tpu.memory_space<vmem>>, %arg3: memref<256x128xbf16, #tpu.memory_space<vmem>>, %arg4: memref<64x128xf32, #tpu.memory_space<vmem>>, %arg5: memref<64x128xf32, #tpu.memory_space<vmem>>) attributes {dimension_semantics = [#tpu.dimension_semantics<parallel>, #tpu.dimension_semantics<arbitrary>], iteration_bounds = array<i64: 1, 1>, scalar_prefetch = 0 : i64, scratch_operands = 1 : i64, tpu.core_type = #tpu.core_type<tc>, window_params = [{transform_indices = @transform_0, window_bounds = array<i64: 64, 256>}, {pipeline_mode = #tpu.pipeline_mode<synchronous>, transform_indices = @transform_1, window_bounds = array<i64: 256, 128>}, {transform_indices = @transform_2, window_bounds = array<i64: 64, 128>}]} {
    %c0_i32 = arith.constant 0 : i32
    %0 = arith.cmpi eq, %arg1, %c0_i32 : i32
    %1 = arith.extui %0 : i1 to i32
    %c0_i32_0 = arith.constant 0 : i32
    %2 = arith.cmpi ne, %1, %c0_i32_0 : i32
    scf.if %2 {
      %cst_10 = arith.constant 0.000000e+00 : f32
      %12 = vector.broadcast %cst_10 : f32 to vector<64x128xf32>
      %c0_11 = arith.constant 0 : index
      %c0_12 = arith.constant 0 : index
      %13 = vector.load %arg5[%c0_11, %c0_12] : memref<64x128xf32, #tpu.memory_space<vmem>>, vector<64x128xf32>
      tpu.vector_store %arg5[%c0_11, %c0_12], %12 {strides = array<i32>} : memref<64x128xf32, #tpu.memory_space<vmem>>, vector<64x128xf32>,
    } else {
    }
    %c0 = arith.constant 0 : index
    %c0_1 = arith.constant 0 : index
    %3 = vector.load %arg5[%c0, %c0_1] : memref<64x128xf32, #tpu.memory_space<vmem>>, vector<64x128xf32>
    %c0_2 = arith.constant 0 : index
    %c0_3 = arith.constant 0 : index
    %4 = vector.load %arg2[%c0_2, %c0_3] : memref<64x256xbf16, #tpu.memory_space<vmem>>, vector<64x256xbf16>
    %c0_4 = arith.constant 0 : index
    %c0_5 = arith.constant 0 : index
    %5 = vector.load %arg3[%c0_4, %c0_5] : memref<256x128xbf16, #tpu.memory_space<vmem>>, vector<256x128xbf16>
    %cst = arith.constant dense<0.000000e+00> : vector<64x128xf32>
    %6 = tpu.matmul %4, %5, %cst {dimension_numbers = #tpu.dot_dimension_numbers<[1], [0], [0], [1], [0, 0, 1, 1], [], []>} : vector<64x256xbf16>, vector<256x128xbf16>, vector<64x128xf32> -> vector<64x128xf32>
    %7 = arith.addf %3, %6 : vector<64x128xf32>
    %c0_6 = arith.constant 0 : index
    %c0_7 = arith.constant 0 : index
    %8 = vector.load %arg5[%c0_6, %c0_7] : memref<64x128xf32, #tpu.memory_space<vmem>>, vector<64x128xf32>
    tpu.vector_store %arg5[%c0_6, %c0_7], %7 {strides = array<i32>} : memref<64x128xf32, #tpu.memory_space<vmem>>, vector<64x128xf32>,
    %c0_i32_8 = arith.constant 0 : i32
    %9 = arith.cmpi eq, %arg1, %c0_i32_8 : i32
    %10 = arith.extui %9 : i1 to i32
    %c0_i32_9 = arith.constant 0 : i32
    %11 = arith.cmpi ne, %10, %c0_i32_9 : i32
    scf.if %11 {
      %c0_10 = arith.constant 0 : index
      %c0_11 = arith.constant 0 : index
      %12 = vector.load %arg5[%c0_10, %c0_11] : memref<64x128xf32, #tpu.memory_space<vmem>>, vector<64x128xf32>
      %cst_12 = arith.constant 0.000000e+00 : f32
      %13 = vector.broadcast %cst_12 : f32 to vector<64x128xf32>
      %14 = arith.subf %13, %12 : vector<64x128xf32>
      %15 = math.exp %14 : vector<64x128xf32>
      %cst_13 = arith.constant 1.000000e+00 : f32
      %16 = vector.broadcast %cst_13 : f32 to vector<64x128xf32>
      %17 = arith.addf %16, %15 : vector<64x128xf32>
      %18 = tpu.reciprocal %17 {approx = true} : vector<64x128xf32> -> vector<64x128xf32>
      %c0_14 = arith.constant 0 : index
      %c0_15 = arith.constant 0 : index
      %19 = vector.load %arg4[%c0_14, %c0_15] : memref<64x128xf32, #tpu.memory_space<vmem>>, vector<64x128xf32>
      tpu.vector_store %arg4[%c0_14, %c0_15], %18 {strides = array<i32>} : memref<64x128xf32, #tpu.memory_space<vmem>>, vector<64x128xf32>,
    } else {
    }
    return
  }
  func.func @transform_0(%arg0: i32, %arg1: i32) -> (i32, i32) {
    %c0_i32 = arith.constant 0 : i32
    return %arg0, %arg1 : i32, i32
  }
  func.func @transform_1(%arg0: i32, %arg1: i32) -> (i32, i32) {
    %c0_i32 = arith.constant 0 : i32
    %c0_i32_0 = arith.constant 0 : i32
    return %arg1, %c0_i32 : i32, i32
  }
  func.func @transform_2(%arg0: i32, %arg1: i32) -> (i32, i32) {
    %c0_i32 = arith.constant 0 : i32
    %c0_i32_0 = arith.constant 0 : i32
    return %arg0, %c0_i32 : i32, i32
  }
}

</mosaic_0001>

<llo_original>
// kernel: discriminator_forward.3
$region0: #{discriminator_forward.3}
  #allocation0 [shape = 'u32[]', space=smem, size = 0x4, offset = 0x4, fixed_abs, tag = 'smem constant byte address 0x4 - core index']
  #allocation1 [shape = 'u32[72,128]{1,0:T(1,128)}', space=vmem, size = 0x9000, scoped, tag = 'internal scratch']
  #allocation2 [shape = 'f32[512,128]{1,0:T(8,128)}', space=vmem, size = 0x40000, scoped, tag = 'scratch operand']
  %s0 = inlined_call_operand.vmem [shape: bf16[512,128], index: 0, kind: input, shape index: {}]
  %s1 = inlined_call_operand.vmem [shape: bf16[128,128], index: 1, kind: input, shape index: {}]
  %s2 = inlined_call_operand.vmem [shape: bf16[512,128], index: 2, kind: output, shape index: {}]
  %s3 = sld [smem:[#allocation0]]
  $region26: #{discriminator_forward.3} parent=0
    _
  %s5 = ssub.s32 1, %s3
  %s6 = scalar_select 0, %s5, %s3
  // Predicated region
  $region2: #{discriminator_forward.3} parent=0 // pred_check
    _
  $region3: #{discriminator_forward.3} parent=0 // pred_check_branch
    %8 = sbr.rel (0) target = $region5
  $region4: #{discriminator_forward.3} parent=0 // pred_region
    _
  $region5: #{discriminator_forward.3} parent=0 // pred_fallthru
    _
  // Predicated region
  $region6: #{discriminator_forward.3} parent=0 // pred_check
    _
  $region7: #{discriminator_forward.3} parent=0 // pred_check_branch
    %10 = sbr.rel (0) target = $region9
  $region8: #{discriminator_forward.3} parent=0 // pred_region
    _
  $region9: #{discriminator_forward.3} parent=0 // pred_fallthru
    _
  %p11 = scmp.eq.s32.totalorder 0, 0
  // Predicated region
  $region10: #{discriminator_forward.3} parent=0 // pred_check
    %p12 = pneg %p11
  $region11: #{discriminator_forward.3} parent=0 // pred_check_branch
    %14 = sbr.rel (%p12) target = $region13
  $region12: #{discriminator_forward.3} parent=0 // pred_region
    %15 = vst [vmem:[#allocation2] sm:$0xff] 0.0
    %16 = vst [vmem:[#allocation2 + $0x8] sm:$0xff] 0.0
    %17 = vst [vmem:[#allocation2 + $0x10] sm:$0xff] 0.0
    %18 = vst [vmem:[#allocation2 + $0x18] sm:$0xff] 0.0
    %19 = vst [vmem:[#allocation2 + $0x20] sm:$0xff] 0.0
    %20 = vst [vmem:[#allocation2 + $0x28] sm:$0xff] 0.0
    %21 = vst [vmem:[#allocation2 + $0x30] sm:$0xff] 0.0
    %22 = vst [vmem:[#allocation2 + $0x38] sm:$0xff] 0.0
    %23 = vst [vmem:[#allocation2 + $0x40] sm:$0xff] 0.0
    %24 = vst [vmem:[#allocation2 + $0x48] sm:$0xff] 0.0
    %25 = vst [vmem:[#allocation2 + $0x50] sm:$0xff] 0.0
    %26 = vst [vmem:[#allocation2 + $0x58] sm:$0xff] 0.0
    %27 = vst [vmem:[#allocation2 + $0x60] sm:$0xff] 0.0
    %28 = vst [vmem:[#allocation2 + $0x68] sm:$0xff] 0.0
    %29 = vst [vmem:[#allocation2 + $0x70] sm:$0xff] 0.0
    %30 = vst [vmem:[#allocation2 + $0x78] sm:$0xff] 0.0
    %31 = vst [vmem:[#allocation2 + $0x80] sm:$0xff] 0.0
    %32 = vst [vmem:[#allocation2 + $0x88] sm:$0xff] 0.0
    %33 = vst [vmem:[#allocation2 + $0x90] sm:$0xff] 0.0
    %34 = vst [vmem:[#allocation2 + $0x98] sm:$0xff] 0.0
    %35 = vst [vmem:[#allocation2 + $0xa0] sm:$0xff] 0.0
    %36 = vst [vmem:[#allocation2 + $0xa8] sm:$0xff] 0.0
    %37 = vst [vmem:[#allocation2 + $0xb0] sm:$0xff] 0.0
    %38 = vst [vmem:[#allocation2 + $0xb8] sm:$0xff] 0.0
    %39 = vst [vmem:[#allocation2 + $0xc0] sm:$0xff] 0.0
    %40 = vst [vmem:[#allocation2 + $0xc8] sm:$0xff] 0.0
    %41 = vst [vmem:[#allocation2 + $0xd0] sm:$0xff] 0.0
    %42 = vst [vmem:[#allocation2 + $0xd8] sm:$0xff] 0.0
    %43 = vst [vmem:[#allocation2 + $0xe0] sm:$0xff] 0.0
    %44 = vst [vmem:[#allocation2 + $0xe8] sm:$0xff] 0.0
    %45 = vst [vmem:[#allocation2 + $0xf0] sm:$0xff] 0.0
    %46 = vst [vmem:[#allocation2 + $0xf8] sm:$0xff] 0.0
    %47 = vst [vmem:[#allocation2 + $0x100] sm:$0xff] 0.0
    %48 = vst [vmem:[#allocation2 + $0x108] sm:$0xff] 0.0
    %49 = vst [vmem:[#allocation2 + $0x110] sm:$0xff] 0.0
    %50 = vst [vmem:[#allocation2 + $0x118] sm:$0xff] 0.0
    %51 = vst [vmem:[#allocation2 + $0x120] sm:$0xff] 0.0
    %52 = vst [vmem:[#allocation2 + $0x128] sm:$0xff] 0.0
    %53 = vst [vmem:[#allocation2 + $0x130] sm:$0xff] 0.0
    %54 = vst [vmem:[#allocation2 + $0x138] sm:$0xff] 0.0
    %55 = vst [vmem:[#allocation2 + $0x140] sm:$0xff] 0.0
    %56 = vst [vmem:[#allocation2 + $0x148] sm:$0xff] 0.0
    %57 = vst [vmem:[#allocation2 + $0x150] sm:$0xff] 0.0
    %58 = vst [vmem:[#allocation2 + $0x158] sm:$0xff] 0.0
    %59 = vst [vmem:[#allocation2 + $0x160] sm:$0xff] 0.0
    %60 = vst [vmem:[#allocation2 + $0x168] sm:$0xff] 0.0
    %61 = vst [vmem:[#allocation2 + $0x170] sm:$0xff] 0.0
    %62 = vst [vmem:[#allocation2 + $0x178] sm:$0xff] 0.0
    %63 = vst [vmem:[#allocation2 + $0x180] sm:$0xff] 0.0
    %64 = vst [vmem:[#allocation2 + $0x188] sm:$0xff] 0.0
    %65 = vst [vmem:[#allocation2 + $0x190] sm:$0xff] 0.0
    %66 = vst [vmem:[#allocation2 + $0x198] sm:$0xff] 0.0
    %67 = vst [vmem:[#allocation2 + $0x1a0] sm:$0xff] 0.0
    %68 = vst [vmem:[#allocation2 + $0x1a8] sm:$0xff] 0.0
    %69 = vst [vmem:[#allocation2 + $0x1b0] sm:$0xff] 0.0
    %70 = vst [vmem:[#allocation2 + $0x1b8] sm:$0xff] 0.0
    %71 = vst [vmem:[#allocation2 + $0x1c0] sm:$0xff] 0.0
    %72 = vst [vmem:[#allocation2 + $0x1c8] sm:$0xff] 0.0
    %73 = vst [vmem:[#allocation2 + $0x1d0] sm:$0xff] 0.0
    %74 = vst [vmem:[#allocation2 + $0x1d8] sm:$0xff] 0.0
    %75 = vst [vmem:[#allocation2 + $0x1e0] sm:$0xff] 0.0
    %76 = vst [vmem:[#allocation2 + $0x1e8] sm:$0xff] 0.0
    %77 = vst [vmem:[#allocation2 + $0x1f0] sm:$0xff] 0.0
    %78 = vst [vmem:[#allocation2 + $0x1f8] sm:$0xff] 0.0
  $region13: #{discriminator_forward.3} parent=0 // pred_fallthru
    _
  %v79 = vld [vmem:[#allocation2] sm:$0xff]
  %v80 = vld [vmem:[#allocation2 + $0x8] sm:$0xff]
  %v81 = vld [vmem:[#allocation2 + $0x10] sm:$0xff]
  %v82 = vld [vmem:[#allocation2 + $0x18] sm:$0xff]
  %v83 = vld [vmem:[#allocation2 + $0x20] sm:$0xff]
  %v84 = vld [vmem:[#allocation2 + $0x28] sm:$0xff]
  %v85 = vld [vmem:[#allocation2 + $0x30] sm:$0xff]
  %v86 = vld [vmem:[#allocation2 + $0x38] sm:$0xff]
  %v87 = vld [vmem:[#allocation2 + $0x40] sm:$0xff]
  %v88 = vld [vmem:[#allocation2 + $0x48] sm:$0xff]
  %v89 = vld [vmem:[#allocation2 + $0x50] sm:$0xff]
  %v90 = vld [vmem:[#allocation2 + $0x58] sm:$0xff]
  %v91 = vld [vmem:[#allocation2 + $0x60] sm:$0xff]
  %v92 = vld [vmem:[#allocation2 + $0x68] sm:$0xff]
  %v93 = vld [vmem:[#allocation2 + $0x70] sm:$0xff]
  %v94 = vld [vmem:[#allocation2 + $0x78] sm:$0xff]
  %v95 = vld [vmem:[#allocation2 + $0x80] sm:$0xff]
  %v96 = vld [vmem:[#allocation2 + $0x88] sm:$0xff]
  %v97 = vld [vmem:[#allocation2 + $0x90] sm:$0xff]
  %v98 = vld [vmem:[#allocation2 + $0x98] sm:$0xff]
  %v99 = vld [vmem:[#allocation2 + $0xa0] sm:$0xff]
  %v100 = vld [vmem:[#allocation2 + $0xa8] sm:$0xff]
  %v101 = vld [vmem:[#allocation2 + $0xb0] sm:$0xff]
  %v102 = vld [vmem:[#allocation2 + $0xb8] sm:$0xff]
  %v103 = vld [vmem:[#allocation2 + $0xc0] sm:$0xff]
  %v104 = vld [vmem:[#allocation2 + $0xc8] sm:$0xff]
  %v105 = vld [vmem:[#allocation2 + $0xd0] sm:$0xff]
  %v106 = vld [vmem:[#allocation2 + $0xd8] sm:$0xff]
  %v107 = vld [vmem:[#allocation2 + $0xe0] sm:$0xff]
  %v108 = vld [vmem:[#allocation2 + $0xe8] sm:$0xff]
  %v109 = vld [vmem:[#allocation2 + $0xf0] sm:$0xff]
  %v110 = vld [vmem:[#allocation2 + $0xf8] sm:$0xff]
  %v111 = vld [vmem:[#allocation2 + $0x100] sm:$0xff]
  %v112 = vld [vmem:[#allocation2 + $0x108] sm:$0xff]
  %v113 = vld [vmem:[#allocation2 + $0x110] sm:$0xff]
  %v114 = vld [vmem:[#allocation2 + $0x118] sm:$0xff]
  %v115 = vld [vmem:[#allocation2 + $0x120] sm:$0xff]
  %v116 = vld [vmem:[#allocation2 + $0x128] sm:$0xff]
  %v117 = vld [vmem:[#allocation2 + $0x130] sm:$0xff]
  %v118 = vld [vmem:[#allocation2 + $0x138] sm:$0xff]
  %v119 = vld [vmem:[#allocation2 + $0x140] sm:$0xff]
  %v120 = vld [vmem:[#allocation2 + $0x148] sm:$0xff]
  %v121 = vld [vmem:[#allocation2 + $0x150] sm:$0xff]
  %v122 = vld [vmem:[#allocation2 + $0x158] sm:$0xff]
  %v123 = vld [vmem:[#allocation2 + $0x160] sm:$0xff]
  %v124 = vld [vmem:[#allocation2 + $0x168] sm:$0xff]
  %v125 = vld [vmem:[#allocation2 + $0x170] sm:$0xff]
  %v126 = vld [vmem:[#allocation2 + $0x178] sm:$0xff]
  %v127 = vld [vmem:[#allocation2 + $0x180] sm:$0xff]
  %v128 = vld [vmem:[#allocation2 + $0x188] sm:$0xff]
  %v129 = vld [vmem:[#allocation2 + $0x190] sm:$0xff]
  %v130 = vld [vmem:[#allocation2 + $0x198] sm:$0xff]
  %v131 = vld [vmem:[#allocation2 + $0x1a0] sm:$0xff]
  %v132 = vld [vmem:[#allocation2 + $0x1a8] sm:$0xff]
  %v133 = vld [vmem:[#allocation2 + $0x1b0] sm:$0xff]
  %v134 = vld [vmem:[#allocation2 + $0x1b8] sm:$0xff]
  %v135 = vld [vmem:[#allocation2 + $0x1c0] sm:$0xff]
  %v136 = vld [vmem:[#allocation2 + $0x1c8] sm:$0xff]
  %v137 = vld [vmem:[#allocation2 + $0x1d0] sm:$0xff]
  %v138 = vld [vmem:[#allocation2 + $0x1d8] sm:$0xff]
  %v139 = vld [vmem:[#allocation2 + $0x1e0] sm:$0xff]
  %v140 = vld [vmem:[#allocation2 + $0x1e8] sm:$0xff]
  %v141 = vld [vmem:[#allocation2 + $0x1f0] sm:$0xff]
  %v142 = vld [vmem:[#allocation2 + $0x1f8] sm:$0xff]
  %v143 = vld [vmem:[%s0] sm:$0xf]
  %v144 = vld [vmem:[%s0 + $0x4] sm:$0xf]
  %v145 = vld [vmem:[%s0 + $0x8] sm:$0xf]
  %v146 = vld [vmem:[%s0 + $0xc] sm:$0xf]
  %v147 = vld [vmem:[%s0 + $0x10] sm:$0xf]
  %v148 = vld [vmem:[%s0 + $0x14] sm:$0xf]
  %v149 = vld [vmem:[%s0 + $0x18] sm:$0xf]
  %v150 = vld [vmem:[%s0 + $0x1c] sm:$0xf]
  %v151 = vld [vmem:[%s0 + $0x20] sm:$0xf]
  %v152 = vld [vmem:[%s0 + $0x24] sm:$0xf]
  %v153 = vld [vmem:[%s0 + $0x28] sm:$0xf]
  %v154 = vld [vmem:[%s0 + $0x2c] sm:$0xf]
  %v155 = vld [vmem:[%s0 + $0x30] sm:$0xf]
  %v156 = vld [vmem:[%s0 + $0x34] sm:$0xf]
  %v157 = vld [vmem:[%s0 + $0x38] sm:$0xf]
  %v158 = vld [vmem:[%s0 + $0x3c] sm:$0xf]
  %v159 = vld [vmem:[%s0 + $0x40] sm:$0xf]
  %v160 = vld [vmem:[%s0 + $0x44] sm:$0xf]
  %v161 = vld [vmem:[%s0 + $0x48] sm:$0xf]
  %v162 = vld [vmem:[%s0 + $0x4c] sm:$0xf]
  %v163 = vld [vmem:[%s0 + $0x50] sm:$0xf]
  %v164 = vld [vmem:[%s0 + $0x54] sm:$0xf]
  %v165 = vld [vmem:[%s0 + $0x58] sm:$0xf]
  %v166 = vld [vmem:[%s0 + $0x5c] sm:$0xf]
  %v167 = vld [vmem:[%s0 + $0x60] sm:$0xf]
  %v168 = vld [vmem:[%s0 + $0x64] sm:$0xf]
  %v169 = vld [vmem:[%s0 + $0x68] sm:$0xf]
  %v170 = vld [vmem:[%s0 + $0x6c] sm:$0xf]
  %v171 = vld [vmem:[%s0 + $0x70] sm:$0xf]
  %v172 = vld [vmem:[%s0 + $0x74] sm:$0xf]
  %v173 = vld [vmem:[%s0 + $0x78] sm:$0xf]
  %v174 = vld [vmem:[%s0 + $0x7c] sm:$0xf]
  %v175 = vld [vmem:[%s0 + $0x80] sm:$0xf]
  %v176 = vld [vmem:[%s0 + $0x84] sm:$0xf]
  %v177 = vld [vmem:[%s0 + $0x88] sm:$0xf]
  %v178 = vld [vmem:[%s0 + $0x8c] sm:$0xf]
  %v179 = vld [vmem:[%s0 + $0x90] sm:$0xf]
  %v180 = vld [vmem:[%s0 + $0x94] sm:$0xf]
  %v181 = vld [vmem:[%s0 + $0x98] sm:$0xf]
  %v182 = vld [vmem:[%s0 + $0x9c] sm:$0xf]
  %v183 = vld [vmem:[%s0 + $0xa0] sm:$0xf]
  %v184 = vld [vmem:[%s0 + $0xa4] sm:$0xf]
  %v185 = vld [vmem:[%s0 + $0xa8] sm:$0xf]
  %v186 = vld [vmem:[%s0 + $0xac] sm:$0xf]
  %v187 = vld [vmem:[%s0 + $0xb0] sm:$0xf]
  %v188 = vld [vmem:[%s0 + $0xb4] sm:$0xf]
  %v189 = vld [vmem:[%s0 + $0xb8] sm:$0xf]
  %v190 = vld [vmem:[%s0 + $0xbc] sm:$0xf]
  %v191 = vld [vmem:[%s0 + $0xc0] sm:$0xf]
  %v192 = vld [vmem:[%s0 + $0xc4] sm:$0xf]
  %v193 = vld [vmem:[%s0 + $0xc8] sm:$0xf]
  %v194 = vld [vmem:[%s0 + $0xcc] sm:$0xf]
  %v195 = vld [vmem:[%s0 + $0xd0] sm:$0xf]
  %v196 = vld [vmem:[%s0 + $0xd4] sm:$0xf]
  %v197 = vld [vmem:[%s0 + $0xd8] sm:$0xf]
  %v198 = vld [vmem:[%s0 + $0xdc] sm:$0xf]
  %v199 = vld [vmem:[%s0 + $0xe0] sm:$0xf]
  %v200 = vld [vmem:[%s0 + $0xe4] sm:$0xf]
  %v201 = vld [vmem:[%s0 + $0xe8] sm:$0xf]
  %v202 = vld [vmem:[%s0 + $0xec] sm:$0xf]
  %v203 = vld [vmem:[%s0 + $0xf0] sm:$0xf]
  %v204 = vld [vmem:[%s0 + $0xf4] sm:$0xf]
  %v205 = vld [vmem:[%s0 + $0xf8] sm:$0xf]
  %v206 = vld [vmem:[%s0 + $0xfc] sm:$0xf]
  %v207 = vld [vmem:[%s1] sm:$0xf]
  %v208 = vld [vmem:[%s1 + $0x4] sm:$0xf]
  %v209 = vld [vmem:[%s1 + $0x8] sm:$0xf]
  %v210 = vld [vmem:[%s1 + $0xc] sm:$0xf]
  %v211 = vld [vmem:[%s1 + $0x10] sm:$0xf]
  %v212 = vld [vmem:[%s1 + $0x14] sm:$0xf]
  %v213 = vld [vmem:[%s1 + $0x18] sm:$0xf]
  %v214 = vld [vmem:[%s1 + $0x1c] sm:$0xf]
  %v215 = vld [vmem:[%s1 + $0x20] sm:$0xf]
  %v216 = vld [vmem:[%s1 + $0x24] sm:$0xf]
  %v217 = vld [vmem:[%s1 + $0x28] sm:$0xf]
  %v218 = vld [vmem:[%s1 + $0x2c] sm:$0xf]
  %v219 = vld [vmem:[%s1 + $0x30] sm:$0xf]
  %v220 = vld [vmem:[%s1 + $0x34] sm:$0xf]
  %v221 = vld [vmem:[%s1 + $0x38] sm:$0xf]
  %v222 = vld [vmem:[%s1 + $0x3c] sm:$0xf]
  %v287 = vunpack.c.l.b16 %v143
  %v288 = vunpack.c.l.b16 %v144
  %v289 = vunpack.c.l.b16 %v145
  %v290 = vunpack.c.l.b16 %v146
  %v291 = vunpack.c.l.b16 %v147
  %v292 = vunpack.c.l.b16 %v148
  %v293 = vunpack.c.l.b16 %v149
  %v294 = vunpack.c.l.b16 %v150
  %v295 = vunpack.c.l.b16 %v151
  %v296 = vunpack.c.l.b16 %v152
  %v297 = vunpack.c.l.b16 %v153
  %v298 = vunpack.c.l.b16 %v154
  %v299 = vunpack.c.l.b16 %v155
  %v300 = vunpack.c.l.b16 %v156
  %v301 = vunpack.c.l.b16 %v157
  %v302 = vunpack.c.l.b16 %v158
  %v303 = vunpack.c.l.b16 %v159
  %v304 = vunpack.c.l.b16 %v160
  %v305 = vunpack.c.l.b16 %v161
  %v306 = vunpack.c.l.b16 %v162
  %v307 = vunpack.c.l.b16 %v163
  %v308 = vunpack.c.l.b16 %v164
  %v309 = vunpack.c.l.b16 %v165
  %v310 = vunpack.c.l.b16 %v166
  %v311 = vunpack.c.l.b16 %v167
  %v312 = vunpack.c.l.b16 %v168
  %v313 = vunpack.c.l.b16 %v169
  %v314 = vunpack.c.l.b16 %v170
  %v315 = vunpack.c.l.b16 %v171
  %v316 = vunpack.c.l.b16 %v172
  %v317 = vunpack.c.l.b16 %v173
  %v318 = vunpack.c.l.b16 %v174
  %v319 = vunpack.c.l.b16 %v175
  %v320 = vunpack.c.l.b16 %v176
  %v321 = vunpack.c.l.b16 %v177
  %v322 = vunpack.c.l.b16 %v178
  %v323 = vunpack.c.l.b16 %v179
  %v324 = vunpack.c.l.b16 %v180
  %v325 = vunpack.c.l.b16 %v181
  %v326 = vunpack.c.l.b16 %v182
  %v327 = vunpack.c.l.b16 %v183
  %v328 = vunpack.c.l.b16 %v184
  %v329 = vunpack.c.l.b16 %v185
  %v330 = vunpack.c.l.b16 %v186
  %v331 = vunpack.c.l.b16 %v187
  %v332 = vunpack.c.l.b16 %v188
  %v333 = vunpack.c.l.b16 %v189
  %v334 = vunpack.c.l.b16 %v190
  %v335 = vunpack.c.l.b16 %v191
  %v336 = vunpack.c.l.b16 %v192
  %v337 = vunpack.c.l.b16 %v193
  %v338 = vunpack.c.l.b16 %v194
  %v339 = vunpack.c.l.b16 %v195
  %v340 = vunpack.c.l.b16 %v196
  %v341 = vunpack.c.l.b16 %v197
  %v342 = vunpack.c.l.b16 %v198
  %v343 = vunpack.c.l.b16 %v199
  %v344 = vunpack.c.l.b16 %v200
  %v345 = vunpack.c.l.b16 %v201
  %v346 = vunpack.c.l.b16 %v202
  %v347 = vunpack.c.l.b16 %v203
  %v348 = vunpack.c.l.b16 %v204
  %v349 = vunpack.c.l.b16 %v205
  %v350 = vunpack.c.l.b16 %v206
  %v351 = vpack.c.b16 %v288, %v287
  %v352 = vpack.c.b16 %v290, %v289
  %v353 = vpack.c.b16 %v292, %v291
  %v354 = vpack.c.b16 %v294, %v293
  %v355 = vpack.c.b16 %v296, %v295
  %v356 = vpack.c.b16 %v298, %v297
  %v357 = vpack.c.b16 %v300, %v299
  %v358 = vpack.c.b16 %v302, %v301
  %v359 = vpack.c.b16 %v304, %v303
  %v360 = vpack.c.b16 %v306, %v305
  %v361 = vpack.c.b16 %v308, %v307
  %v362 = vpack.c.b16 %v310, %v309
  %v363 = vpack.c.b16 %v312, %v311
  %v364 = vpack.c.b16 %v314, %v313
  %v365 = vpack.c.b16 %v316, %v315
  %v366 = vpack.c.b16 %v318, %v317
  %v367 = vpack.c.b16 %v320, %v319
  %v368 = vpack.c.b16 %v322, %v321
  %v369 = vpack.c.b16 %v324, %v323
  %v370 = vpack.c.b16 %v326, %v325
  %v371 = vpack.c.b16 %v328, %v327
  %v372 = vpack.c.b16 %v330, %v329
  %v373 = vpack.c.b16 %v332, %v331
  %v374 = vpack.c.b16 %v334, %v333
  %v375 = vpack.c.b16 %v336, %v335
  %v376 = vpack.c.b16 %v338, %v337
  %v377 = vpack.c.b16 %v340, %v339
  %v378 = vpack.c.b16 %v342, %v341
  %v379 = vpack.c.b16 %v344, %v343
  %v380 = vpack.c.b16 %v346, %v345
  %v381 = vpack.c.b16 %v348, %v347
  %v382 = vpack.c.b16 %v350, %v349
  %v431 = vunpack.c.l.b16 %v207
  %v432 = vunpack.c.l.b16 %v208
  %v433 = vunpack.c.l.b16 %v209
  %v434 = vunpack.c.l.b16 %v210
  %v435 = vunpack.c.l.b16 %v211
  %v436 = vunpack.c.l.b16 %v212
  %v437 = vunpack.c.l.b16 %v213
  %v438 = vunpack.c.l.b16 %v214
  %v439 = vunpack.c.l.b16 %v215
  %v440 = vunpack.c.l.b16 %v216
  %v441 = vunpack.c.l.b16 %v217
  %v442 = vunpack.c.l.b16 %v218
  %v443 = vunpack.c.l.b16 %v219
  %v444 = vunpack.c.l.b16 %v220
  %v445 = vunpack.c.l.b16 %v221
  %v446 = vunpack.c.l.b16 %v222
  %v447 = vpack.c.b16 %v432, %v431
  %v448 = vpack.c.b16 %v434, %v433
  %v449 = vpack.c.b16 %v436, %v435
  %v450 = vpack.c.b16 %v438, %v437
  %v451 = vpack.c.b16 %v440, %v439
  %v452 = vpack.c.b16 %v442, %v441
  %v453 = vpack.c.b16 %v444, %v443
  %v454 = vpack.c.b16 %v446, %v445
  %463 = vmatpush.bf16.msra.mxu0 %v454
  %464 = vmatpush.bf16.msra.mxu0 %v453
  %465 = vmatpush.bf16.msra.mxu0 %v452
  %466 = vmatpush.bf16.msra.mxu0 %v451
  %467 = vmatpush.bf16.msra.mxu0 %v450
  %468 = vmatpush.bf16.msra.mxu0 %v449
  %469 = vmatpush.bf16.msra.mxu0 %v448
  %470 = vmatpush.bf16.msra.mxu0 %v447
  %471 = vmatmul.bf16.gmra.mxu0 %v351
  %v472 = vpop.f32.mrf.mxu0
  %v473 = vadd.f32 0.0, %v472
  %v474 = vpop.f32.mrf.mxu0
  %v475 = vadd.f32 0.0, %v474
  %476 = vmatmul.bf16.gmra.mxu0 %v352
  %v477 = vpop.f32.mrf.mxu0
  %v478 = vadd.f32 0.0, %v477
  %v479 = vpop.f32.mrf.mxu0
  %v480 = vadd.f32 0.0, %v479
  %481 = vmatmul.bf16.gmra.mxu0 %v353
  %v482 = vpop.f32.mrf.mxu0
  %v483 = vadd.f32 0.0, %v482
  %v484 = vpop.f32.mrf.mxu0
  %v485 = vadd.f32 0.0, %v484
  %486 = vmatmul.bf16.gmra.mxu0 %v354
  %v487 = vpop.f32.mrf.mxu0
  %v488 = vadd.f32 0.0, %v487
  %v489 = vpop.f32.mrf.mxu0
  %v490 = vadd.f32 0.0, %v489
  %491 = vmatmul.bf16.gmra.mxu0 %v355
  %v492 = vpop.f32.mrf.mxu0
  %v493 = vadd.f32 0.0, %v492
  %v494 = vpop.f32.mrf.mxu0
  %v495 = vadd.f32 0.0, %v494
  %496 = vmatmul.bf16.gmra.mxu0 %v356
  %v497 = vpop.f32.mrf.mxu0
  %v498 = vadd.f32 0.0, %v497
  %v499 = vpop.f32.mrf.mxu0
  %v500 = vadd.f32 0.0, %v499
  %501 = vmatmul.bf16.gmra.mxu0 %v357
  %v502 = vpop.f32.mrf.mxu0
  %v503 = vadd.f32 0.0, %v502
  %v504 = vpop.f32.mrf.mxu0
  %v505 = vadd.f32 0.0, %v504
  %506 = vmatmul.bf16.gmra.mxu0 %v358
  %v507 = vpop.f32.mrf.mxu0
  %v508 = vadd.f32 0.0, %v507
  %v509 = vpop.f32.mrf.mxu0
  %v510 = vadd.f32 0.0, %v509
  %511 = vmatmul.bf16.gmra.mxu0 %v359
  %v512 = vpop.f32.mrf.mxu0
  %v513 = vadd.f32 0.0, %v512
  %v514 = vpop.f32.mrf.mxu0
  %v515 = vadd.f32 0.0, %v514
  %516 = vmatmul.bf16.gmra.mxu0 %v360
  %v517 = vpop.f32.mrf.mxu0
  %v518 = vadd.f32 0.0, %v517
  %v519 = vpop.f32.mrf.mxu0
  %v520 = vadd.f32 0.0, %v519
  %521 = vmatmul.bf16.gmra.mxu0 %v361
  %v522 = vpop.f32.mrf.mxu0
  %v523 = vadd.f32 0.0, %v522
  %v524 = vpop.f32.mrf.mxu0
  %v525 = vadd.f32 0.0, %v524
  %526 = vmatmul.bf16.gmra.mxu0 %v362
  %v527 = vpop.f32.mrf.mxu0
  %v528 = vadd.f32 0.0, %v527
  %v529 = vpop.f32.mrf.mxu0
  %v530 = vadd.f32 0.0, %v529
  %531 = vmatmul.bf16.gmra.mxu0 %v363
  %v532 = vpop.f32.mrf.mxu0
  %v533 = vadd.f32 0.0, %v532
  %v534 = vpop.f32.mrf.mxu0
  %v535 = vadd.f32 0.0, %v534
  %536 = vmatmul.bf16.gmra.mxu0 %v364
  %v537 = vpop.f32.mrf.mxu0
  %v538 = vadd.f32 0.0, %v537
  %v539 = vpop.f32.mrf.mxu0
  %v540 = vadd.f32 0.0, %v539
  %541 = vmatmul.bf16.gmra.mxu0 %v365
  %v542 = vpop.f32.mrf.mxu0
  %v543 = vadd.f32 0.0, %v542
  %v544 = vpop.f32.mrf.mxu0
  %v545 = vadd.f32 0.0, %v544
  %546 = vmatmul.bf16.gmra.mxu0 %v366
  %v547 = vpop.f32.mrf.mxu0
  %v548 = vadd.f32 0.0, %v547
  %v549 = vpop.f32.mrf.mxu0
  %v550 = vadd.f32 0.0, %v549
  %551 = vmatmul.bf16.gmra.mxu0 %v367
  %v552 = vpop.f32.mrf.mxu0
  %v553 = vadd.f32 0.0, %v552
  %v554 = vpop.f32.mrf.mxu0
  %v555 = vadd.f32 0.0, %v554
  %556 = vmatmul.bf16.gmra.mxu0 %v368
  %v557 = vpop.f32.mrf.mxu0
  %v558 = vadd.f32 0.0, %v557
  %v559 = vpop.f32.mrf.mxu0
  %v560 = vadd.f32 0.0, %v559
  %561 = vmatmul.bf16.gmra.mxu0 %v369
  %v562 = vpop.f32.mrf.mxu0
  %v563 = vadd.f32 0.0, %v562
  %v564 = vpop.f32.mrf.mxu0
  %v565 = vadd.f32 0.0, %v564
  %566 = vmatmul.bf16.gmra.mxu0 %v370
  %v567 = vpop.f32.mrf.mxu0
  %v568 = vadd.f32 0.0, %v567
  %v569 = vpop.f32.mrf.mxu0
  %v570 = vadd.f32 0.0, %v569
  %571 = vmatmul.bf16.gmra.mxu0 %v371
  %v572 = vpop.f32.mrf.mxu0
  %v573 = vadd.f32 0.0, %v572
  %v574 = vpop.f32.mrf.mxu0
  %v575 = vadd.f32 0.0, %v574
  %576 = vmatmul.bf16.gmra.mxu0 %v372
  %v577 = vpop.f32.mrf.mxu0
  %v578 = vadd.f32 0.0, %v577
  %v579 = vpop.f32.mrf.mxu0
  %v580 = vadd.f32 0.0, %v579
  %581 = vmatmul.bf16.gmra.mxu0 %v373
  %v582 = vpop.f32.mrf.mxu0
  %v583 = vadd.f32 0.0, %v582
  %v584 = vpop.f32.mrf.mxu0
  %v585 = vadd.f32 0.0, %v584
  %586 = vmatmul.bf16.gmra.mxu0 %v374
  %v587 = vpop.f32.mrf.mxu0
  %v588 = vadd.f32 0.0, %v587
  %v589 = vpop.f32.mrf.mxu0
  %v590 = vadd.f32 0.0, %v589
  %591 = vmatmul.bf16.gmra.mxu0 %v375
  %v592 = vpop.f32.mrf.mxu0
  %v593 = vadd.f32 0.0, %v592
  %v594 = vpop.f32.mrf.mxu0
  %v595 = vadd.f32 0.0, %v594
  %596 = vmatmul.bf16.gmra.mxu0 %v376
  %v597 = vpop.f32.mrf.mxu0
  %v598 = vadd.f32 0.0, %v597
  %v599 = vpop.f32.mrf.mxu0
  %v600 = vadd.f32 0.0, %v599
  %601 = vmatmul.bf16.gmra.mxu0 %v377
  %v602 = vpop.f32.mrf.mxu0
  %v603 = vadd.f32 0.0, %v602
  %v604 = vpop.f32.mrf.mxu0
  %v605 = vadd.f32 0.0, %v604
  %606 = vmatmul.bf16.gmra.mxu0 %v378
  %v607 = vpop.f32.mrf.mxu0
  %v608 = vadd.f32 0.0, %v607
  %v609 = vpop.f32.mrf.mxu0
  %v610 = vadd.f32 0.0, %v609
  %611 = vmatmul.bf16.gmra.mxu0 %v379
  %v612 = vpop.f32.mrf.mxu0
  %v613 = vadd.f32 0.0, %v612
  %v614 = vpop.f32.mrf.mxu0
  %v615 = vadd.f32 0.0, %v614
  %616 = vmatmul.bf16.gmra.mxu0 %v380
  %v617 = vpop.f32.mrf.mxu0
  %v618 = vadd.f32 0.0, %v617
  %v619 = vpop.f32.mrf.mxu0
  %v620 = vadd.f32 0.0, %v619
  %621 = vmatmul.bf16.gmra.mxu0 %v381
  %v622 = vpop.f32.mrf.mxu0
  %v623 = vadd.f32 0.0, %v622
  %v624 = vpop.f32.mrf.mxu0
  %v625 = vadd.f32 0.0, %v624
  %626 = vmatmul.bf16.gmra.mxu0 %v382
  %v627 = vpop.f32.mrf.mxu0
  %v628 = vadd.f32 0.0, %v627
  %v629 = vpop.f32.mrf.mxu0
  %v630 = vadd.f32 0.0, %v629
  %631 = vdwg.mxu0
  %v632 = vadd.f32 %v79, %v473
  %v633 = vadd.f32 %v80, %v475
  %v634 = vadd.f32 %v81, %v478
  %v635 = vadd.f32 %v82, %v480
  %v636 = vadd.f32 %v83, %v483
  %v637 = vadd.f32 %v84, %v485
  %v638 = vadd.f32 %v85, %v488
  %v639 = vadd.f32 %v86, %v490
  %v640 = vadd.f32 %v87, %v493
  %v641 = vadd.f32 %v88, %v495
  %v642 = vadd.f32 %v89, %v498
  %v643 = vadd.f32 %v90, %v500
  %v644 = vadd.f32 %v91, %v503
  %v645 = vadd.f32 %v92, %v505
  %v646 = vadd.f32 %v93, %v508
  %v647 = vadd.f32 %v94, %v510
  %v648 = vadd.f32 %v95, %v513
  %v649 = vadd.f32 %v96, %v515
  %v650 = vadd.f32 %v97, %v518
  %v651 = vadd.f32 %v98, %v520
  %v652 = vadd.f32 %v99, %v523
  %v653 = vadd.f32 %v100, %v525
  %v654 = vadd.f32 %v101, %v528
  %v655 = vadd.f32 %v102, %v530
  %v656 = vadd.f32 %v103, %v533
  %v657 = vadd.f32 %v104, %v535
  %v658 = vadd.f32 %v105, %v538
  %v659 = vadd.f32 %v106, %v540
  %v660 = vadd.f32 %v107, %v543
  %v661 = vadd.f32 %v108, %v545
  %v662 = vadd.f32 %v109, %v548
  %v663 = vadd.f32 %v110, %v550
  %v664 = vadd.f32 %v111, %v553
  %v665 = vadd.f32 %v112, %v555
  %v666 = vadd.f32 %v113, %v558
  %v667 = vadd.f32 %v114, %v560
  %v668 = vadd.f32 %v115, %v563
  %v669 = vadd.f32 %v116, %v565
  %v670 = vadd.f32 %v117, %v568
  %v671 = vadd.f32 %v118, %v570
  %v672 = vadd.f32 %v119, %v573
  %v673 = vadd.f32 %v120, %v575
  %v674 = vadd.f32 %v121, %v578
  %v675 = vadd.f32 %v122, %v580
  %v676 = vadd.f32 %v123, %v583
  %v677 = vadd.f32 %v124, %v585
  %v678 = vadd.f32 %v125, %v588
  %v679 = vadd.f32 %v126, %v590
  %v680 = vadd.f32 %v127, %v593
  %v681 = vadd.f32 %v128, %v595
  %v682 = vadd.f32 %v129, %v598
  %v683 = vadd.f32 %v130, %v600
  %v684 = vadd.f32 %v131, %v603
  %v685 = vadd.f32 %v132, %v605
  %v686 = vadd.f32 %v133, %v608
  %v687 = vadd.f32 %v134, %v610
  %v688 = vadd.f32 %v135, %v613
  %v689 = vadd.f32 %v136, %v615
  %v690 = vadd.f32 %v137, %v618
  %v691 = vadd.f32 %v138, %v620
  %v692 = vadd.f32 %v139, %v623
  %v693 = vadd.f32 %v140, %v625
  %v694 = vadd.f32 %v141, %v628
  %v695 = vadd.f32 %v142, %v630
  %696 = vst [vmem:[#allocation2] sm:$0xff] %v632
  %697 = vst [vmem:[#allocation2 + $0x8] sm:$0xff] %v633
  %698 = vst [vmem:[#allocation2 + $0x10] sm:$0xff] %v634
  %699 = vst [vmem:[#allocation2 + $0x18] sm:$0xff] %v635
  %700 = vst [vmem:[#allocation2 + $0x20] sm:$0xff] %v636
  %701 = vst [vmem:[#allocation2 + $0x28] sm:$0xff] %v637
  %702 = vst [vmem:[#allocation2 + $0x30] sm:$0xff] %v638
  %703 = vst [vmem:[#allocation2 + $0x38] sm:$0xff] %v639
  %704 = vst [vmem:[#allocation2 + $0x40] sm:$0xff] %v640
  %705 = vst [vmem:[#allocation2 + $0x48] sm:$0xff] %v641
  %706 = vst [vmem:[#allocation2 + $0x50] sm:$0xff] %v642
  %707 = vst [vmem:[#allocation2 + $0x58] sm:$0xff] %v643
  %708 = vst [vmem:[#allocation2 + $0x60] sm:$0xff] %v644
  %709 = vst [vmem:[#allocation2 + $0x68] sm:$0xff] %v645
  %710 = vst [vmem:[#allocation2 + $0x70] sm:$0xff] %v646
  %711 = vst [vmem:[#allocation2 + $0x78] sm:$0xff] %v647
  %712 = vst [vmem:[#allocation2 + $0x80] sm:$0xff] %v648
  %713 = vst [vmem:[#allocation2 + $0x88] sm:$0xff] %v649
  %714 = vst [vmem:[#allocation2 + $0x90] sm:$0xff] %v650
  %715 = vst [vmem:[#allocation2 + $0x98] sm:$0xff] %v651
  %716 = vst [vmem:[#allocation2 + $0xa0] sm:$0xff] %v652
  %717 = vst [vmem:[#allocation2 + $0xa8] sm:$0xff] %v653
  %718 = vst [vmem:[#allocation2 + $0xb0] sm:$0xff] %v654
  %719 = vst [vmem:[#allocation2 + $0xb8] sm:$0xff] %v655
  %720 = vst [vmem:[#allocation2 + $0xc0] sm:$0xff] %v656
  %721 = vst [vmem:[#allocation2 + $0xc8] sm:$0xff] %v657
  %722 = vst [vmem:[#allocation2 + $0xd0] sm:$0xff] %v658
  %723 = vst [vmem:[#allocation2 + $0xd8] sm:$0xff] %v659
  %724 = vst [vmem:[#allocation2 + $0xe0] sm:$0xff] %v660
  %725 = vst [vmem:[#allocation2 + $0xe8] sm:$0xff] %v661
  %726 = vst [vmem:[#allocation2 + $0xf0] sm:$0xff] %v662
  %727 = vst [vmem:[#allocation2 + $0xf8] sm:$0xff] %v663
  %728 = vst [vmem:[#allocation2 + $0x100] sm:$0xff] %v664
  %729 = vst [vmem:[#allocation2 + $0x108] sm:$0xff] %v665
  %730 = vst [vmem:[#allocation2 + $0x110] sm:$0xff] %v666
  %731 = vst [vmem:[#allocation2 + $0x118] sm:$0xff] %v667
  %732 = vst [vmem:[#allocation2 + $0x120] sm:$0xff] %v668
  %733 = vst [vmem:[#allocation2 + $0x128] sm:$0xff] %v669
  %734 = vst [vmem:[#allocation2 + $0x130] sm:$0xff] %v670
  %735 = vst [vmem:[#allocation2 + $0x138] sm:$0xff] %v671
  %736 = vst [vmem:[#allocation2 + $0x140] sm:$0xff] %v672
  %737 = vst [vmem:[#allocation2 + $0x148] sm:$0xff] %v673
  %738 = vst [vmem:[#allocation2 + $0x150] sm:$0xff] %v674
  %739 = vst [vmem:[#allocation2 + $0x158] sm:$0xff] %v675
  %740 = vst [vmem:[#allocation2 + $0x160] sm:$0xff] %v676
  %741 = vst [vmem:[#allocation2 + $0x168] sm:$0xff] %v677
  %742 = vst [vmem:[#allocation2 + $0x170] sm:$0xff] %v678
  %743 = vst [vmem:[#allocation2 + $0x178] sm:$0xff] %v679
  %744 = vst [vmem:[#allocation2 + $0x180] sm:$0xff] %v680
  %745 = vst [vmem:[#allocation2 + $0x188] sm:$0xff] %v681
  %746 = vst [vmem:[#allocation2 + $0x190] sm:$0xff] %v682
  %747 = vst [vmem:[#allocation2 + $0x198] sm:$0xff] %v683
  %748 = vst [vmem:[#allocation2 + $0x1a0] sm:$0xff] %v684
  %749 = vst [vmem:[#allocation2 + $0x1a8] sm:$0xff] %v685
  %750 = vst [vmem:[#allocation2 + $0x1b0] sm:$0xff] %v686
  %751 = vst [vmem:[#allocation2 + $0x1b8] sm:$0xff] %v687
  %752 = vst [vmem:[#allocation2 + $0x1c0] sm:$0xff] %v688
  %753 = vst [vmem:[#allocation2 + $0x1c8] sm:$0xff] %v689
  %754 = vst [vmem:[#allocation2 + $0x1d0] sm:$0xff] %v690
  %755 = vst [vmem:[#allocation2 + $0x1d8] sm:$0xff] %v691
  %756 = vst [vmem:[#allocation2 + $0x1e0] sm:$0xff] %v692
  %757 = vst [vmem:[#allocation2 + $0x1e8] sm:$0xff] %v693
  %758 = vst [vmem:[#allocation2 + $0x1f0] sm:$0xff] %v694
  %759 = vst [vmem:[#allocation2 + $0x1f8] sm:$0xff] %v695
  // Predicated region
  $region14: #{discriminator_forward.3} parent=0 // pred_check
    %p760 = pneg %p11
  $region15: #{discriminator_forward.3} parent=0 // pred_check_branch
    %762 = sbr.rel (%p760) target = $region17
  $region16: #{discriminator_forward.3} parent=0 // pred_region
    %v763 = vld [vmem:[#allocation2] sm:$0xff]
    %v764 = vld [vmem:[#allocation2 + $0x8] sm:$0xff]
    %v765 = vld [vmem:[#allocation2 + $0x10] sm:$0xff]
    %v766 = vld [vmem:[#allocation2 + $0x18] sm:$0xff]
    %v767 = vld [vmem:[#allocation2 + $0x20] sm:$0xff]
    %v768 = vld [vmem:[#allocation2 + $0x28] sm:$0xff]
    %v769 = vld [vmem:[#allocation2 + $0x30] sm:$0xff]
    %v770 = vld [vmem:[#allocation2 + $0x38] sm:$0xff]
    %v771 = vld [vmem:[#allocation2 + $0x40] sm:$0xff]
    %v772 = vld [vmem:[#allocation2 + $0x48] sm:$0xff]
    %v773 = vld [vmem:[#allocation2 + $0x50] sm:$0xff]
    %v774 = vld [vmem:[#allocation2 + $0x58] sm:$0xff]
    %v775 = vld [vmem:[#allocation2 + $0x60] sm:$0xff]
    %v776 = vld [vmem:[#allocation2 + $0x68] sm:$0xff]
    %v777 = vld [vmem:[#allocation2 + $0x70] sm:$0xff]
    %v778 = vld [vmem:[#allocation2 + $0x78] sm:$0xff]
    %v779 = vld [vmem:[#allocation2 + $0x80] sm:$0xff]
    %v780 = vld [vmem:[#allocation2 + $0x88] sm:$0xff]
    %v781 = vld [vmem:[#allocation2 + $0x90] sm:$0xff]
    %v782 = vld [vmem:[#allocation2 + $0x98] sm:$0xff]
    %v783 = vld [vmem:[#allocation2 + $0xa0] sm:$0xff]
    %v784 = vld [vmem:[#allocation2 + $0xa8] sm:$0xff]
    %v785 = vld [vmem:[#allocation2 + $0xb0] sm:$0xff]
    %v786 = vld [vmem:[#allocation2 + $0xb8] sm:$0xff]
    %v787 = vld [vmem:[#allocation2 + $0xc0] sm:$0xff]
    %v788 = vld [vmem:[#allocation2 + $0xc8] sm:$0xff]
    %v789 = vld [vmem:[#allocation2 + $0xd0] sm:$0xff]
    %v790 = vld [vmem:[#allocation2 + $0xd8] sm:$0xff]
    %v791 = vld [vmem:[#allocation2 + $0xe0] sm:$0xff]
    %v792 = vld [vmem:[#allocation2 + $0xe8] sm:$0xff]
    %v793 = vld [vmem:[#allocation2 + $0xf0] sm:$0xff]
    %v794 = vld [vmem:[#allocation2 + $0xf8] sm:$0xff]
    %v795 = vld [vmem:[#allocation2 + $0x100] sm:$0xff]
    %v796 = vld [vmem:[#allocation2 + $0x108] sm:$0xff]
    %v797 = vld [vmem:[#allocation2 + $0x110] sm:$0xff]
    %v798 = vld [vmem:[#allocation2 + $0x118] sm:$0xff]
    %v799 = vld [vmem:[#allocation2 + $0x120] sm:$0xff]
    %v800 = vld [vmem:[#allocation2 + $0x128] sm:$0xff]
    %v801 = vld [vmem:[#allocation2 + $0x130] sm:$0xff]
    %v802 = vld [vmem:[#allocation2 + $0x138] sm:$0xff]
    %v803 = vld [vmem:[#allocation2 + $0x140] sm:$0xff]
    %v804 = vld [vmem:[#allocation2 + $0x148] sm:$0xff]
    %v805 = vld [vmem:[#allocation2 + $0x150] sm:$0xff]
    %v806 = vld [vmem:[#allocation2 + $0x158] sm:$0xff]
    %v807 = vld [vmem:[#allocation2 + $0x160] sm:$0xff]
    %v808 = vld [vmem:[#allocation2 + $0x168] sm:$0xff]
    %v809 = vld [vmem:[#allocation2 + $0x170] sm:$0xff]
    %v810 = vld [vmem:[#allocation2 + $0x178] sm:$0xff]
    %v811 = vld [vmem:[#allocation2 + $0x180] sm:$0xff]
    %v812 = vld [vmem:[#allocation2 + $0x188] sm:$0xff]
    %v813 = vld [vmem:[#allocation2 + $0x190] sm:$0xff]
    %v814 = vld [vmem:[#allocation2 + $0x198] sm:$0xff]
    %v815 = vld [vmem:[#allocation2 + $0x1a0] sm:$0xff]
    %v816 = vld [vmem:[#allocation2 + $0x1a8] sm:$0xff]
    %v817 = vld [vmem:[#allocation2 + $0x1b0] sm:$0xff]
    %v818 = vld [vmem:[#allocation2 + $0x1b8] sm:$0xff]
    %v819 = vld [vmem:[#allocation2 + $0x1c0] sm:$0xff]
    %v820 = vld [vmem:[#allocation2 + $0x1c8] sm:$0xff]
    %v821 = vld [vmem:[#allocation2 + $0x1d0] sm:$0xff]
    %v822 = vld [vmem:[#allocation2 + $0x1d8] sm:$0xff]
    %v823 = vld [vmem:[#allocation2 + $0x1e0] sm:$0xff]
    %v824 = vld [vmem:[#allocation2 + $0x1e8] sm:$0xff]
    %v825 = vld [vmem:[#allocation2 + $0x1f0] sm:$0xff]
    %v826 = vld [vmem:[#allocation2 + $0x1f8] sm:$0xff]
    %vm827 = vcmp.ge.f32.partialorder %v763, 0.0
    %vm828 = vcmp.ge.f32.partialorder %v764, 0.0
    %vm829 = vcmp.ge.f32.partialorder %v765, 0.0
    %vm830 = vcmp.ge.f32.partialorder %v766, 0.0
    %vm831 = vcmp.ge.f32.partialorder %v767, 0.0
    %vm832 = vcmp.ge.f32.partialorder %v768, 0.0
    %vm833 = vcmp.ge.f32.partialorder %v769, 0.0
    %vm834 = vcmp.ge.f32.partialorder %v770, 0.0
    %vm835 = vcmp.ge.f32.partialorder %v771, 0.0
    %vm836 = vcmp.ge.f32.partialorder %v772, 0.0
    %vm837 = vcmp.ge.f32.partialorder %v773, 0.0
    %vm838 = vcmp.ge.f32.partialorder %v774, 0.0
    %vm839 = vcmp.ge.f32.partialorder %v775, 0.0
    %vm840 = vcmp.ge.f32.partialorder %v776, 0.0
    %vm841 = vcmp.ge.f32.partialorder %v777, 0.0
    %vm842 = vcmp.ge.f32.partialorder %v778, 0.0
    %vm843 = vcmp.ge.f32.partialorder %v779, 0.0
    %vm844 = vcmp.ge.f32.partialorder %v780, 0.0
    %vm845 = vcmp.ge.f32.partialorder %v781, 0.0
    %vm846 = vcmp.ge.f32.partialorder %v782, 0.0
    %vm847 = vcmp.ge.f32.partialorder %v783, 0.0
    %vm848 = vcmp.ge.f32.partialorder %v784, 0.0
    %vm849 = vcmp.ge.f32.partialorder %v785, 0.0
    %vm850 = vcmp.ge.f32.partialorder %v786, 0.0
    %vm851 = vcmp.ge.f32.partialorder %v787, 0.0
    %vm852 = vcmp.ge.f32.partialorder %v788, 0.0
    %vm853 = vcmp.ge.f32.partialorder %v789, 0.0
    %vm854 = vcmp.ge.f32.partialorder %v790, 0.0
    %vm855 = vcmp.ge.f32.partialorder %v791, 0.0
    %vm856 = vcmp.ge.f32.partialorder %v792, 0.0
    %vm857 = vcmp.ge.f32.partialorder %v793, 0.0
    %vm858 = vcmp.ge.f32.partialorder %v794, 0.0
    %vm859 = vcmp.ge.f32.partialorder %v795, 0.0
    %vm860 = vcmp.ge.f32.partialorder %v796, 0.0
    %vm861 = vcmp.ge.f32.partialorder %v797, 0.0
    %vm862 = vcmp.ge.f32.partialorder %v798, 0.0
    %vm863 = vcmp.ge.f32.partialorder %v799, 0.0
    %vm864 = vcmp.ge.f32.partialorder %v800, 0.0
    %vm865 = vcmp.ge.f32.partialorder %v801, 0.0
    %vm866 = vcmp.ge.f32.partialorder %v802, 0.0
    %vm867 = vcmp.ge.f32.partialorder %v803, 0.0
    %vm868 = vcmp.ge.f32.partialorder %v804, 0.0
    %vm869 = vcmp.ge.f32.partialorder %v805, 0.0
    %vm870 = vcmp.ge.f32.partialorder %v806, 0.0
    %vm871 = vcmp.ge.f32.partialorder %v807, 0.0
    %vm872 = vcmp.ge.f32.partialorder %v808, 0.0
    %vm873 = vcmp.ge.f32.partialorder %v809, 0.0
    %vm874 = vcmp.ge.f32.partialorder %v810, 0.0
    %vm875 = vcmp.ge.f32.partialorder %v811, 0.0
    %vm876 = vcmp.ge.f32.partialorder %v812, 0.0
    %vm877 = vcmp.ge.f32.partialorder %v813, 0.0
    %vm878 = vcmp.ge.f32.partialorder %v814, 0.0
    %vm879 = vcmp.ge.f32.partialorder %v815, 0.0
    %vm880 = vcmp.ge.f32.partialorder %v816, 0.0
    %vm881 = vcmp.ge.f32.partialorder %v817, 0.0
    %vm882 = vcmp.ge.f32.partialorder %v818, 0.0
    %vm883 = vcmp.ge.f32.partialorder %v819, 0.0
    %vm884 = vcmp.ge.f32.partialorder %v820, 0.0
    %vm885 = vcmp.ge.f32.partialorder %v821, 0.0
    %vm886 = vcmp.ge.f32.partialorder %v822, 0.0
    %vm887 = vcmp.ge.f32.partialorder %v823, 0.0
    %vm888 = vcmp.ge.f32.partialorder %v824, 0.0
    %vm889 = vcmp.ge.f32.partialorder %v825, 0.0
    %vm890 = vcmp.ge.f32.partialorder %v826, 0.0
    %v891 = vmul.f32 %v763, 0.2
    %v892 = vmul.f32 %v764, 0.2
    %v893 = vmul.f32 %v765, 0.2
    %v894 = vmul.f32 %v766, 0.2
    %v895 = vmul.f32 %v767, 0.2
    %v896 = vmul.f32 %v768, 0.2
    %v897 = vmul.f32 %v769, 0.2
    %v898 = vmul.f32 %v770, 0.2
    %v899 = vmul.f32 %v771, 0.2
    %v900 = vmul.f32 %v772, 0.2
    %v901 = vmul.f32 %v773, 0.2
    %v902 = vmul.f32 %v774, 0.2
    %v903 = vmul.f32 %v775, 0.2
    %v904 = vmul.f32 %v776, 0.2
    %v905 = vmul.f32 %v777, 0.2
    %v906 = vmul.f32 %v778, 0.2
    %v907 = vmul.f32 %v779, 0.2
    %v908 = vmul.f32 %v780, 0.2
    %v909 = vmul.f32 %v781, 0.2
    %v910 = vmul.f32 %v782, 0.2
    %v911 = vmul.f32 %v783, 0.2
    %v912 = vmul.f32 %v784, 0.2
    %v913 = vmul.f32 %v785, 0.2
    %v914 = vmul.f32 %v786, 0.2
    %v915 = vmul.f32 %v787, 0.2
    %v916 = vmul.f32 %v788, 0.2
    %v917 = vmul.f32 %v789, 0.2
    %v918 = vmul.f32 %v790, 0.2
    %v919 = vmul.f32 %v791, 0.2
    %v920 = vmul.f32 %v792, 0.2
    %v921 = vmul.f32 %v793, 0.2
    %v922 = vmul.f32 %v794, 0.2
    %v923 = vmul.f32 %v795, 0.2
    %v924 = vmul.f32 %v796, 0.2
    %v925 = vmul.f32 %v797, 0.2
    %v926 = vmul.f32 %v798, 0.2
    %v927 = vmul.f32 %v799, 0.2
    %v928 = vmul.f32 %v800, 0.2
    %v929 = vmul.f32 %v801, 0.2
    %v930 = vmul.f32 %v802, 0.2
    %v931 = vmul.f32 %v803, 0.2
    %v932 = vmul.f32 %v804, 0.2
    %v933 = vmul.f32 %v805, 0.2
    %v934 = vmul.f32 %v806, 0.2
    %v935 = vmul.f32 %v807, 0.2
    %v936 = vmul.f32 %v808, 0.2
    %v937 = vmul.f32 %v809, 0.2
    %v938 = vmul.f32 %v810, 0.2
    %v939 = vmul.f32 %v811, 0.2
    %v940 = vmul.f32 %v812, 0.2
    %v941 = vmul.f32 %v813, 0.2
    %v942 = vmul.f32 %v814, 0.2
    %v943 = vmul.f32 %v815, 0.2
    %v944 = vmul.f32 %v816, 0.2
    %v945 = vmul.f32 %v817, 0.2
    %v946 = vmul.f32 %v818, 0.2
    %v947 = vmul.f32 %v819, 0.2
    %v948 = vmul.f32 %v820, 0.2
    %v949 = vmul.f32 %v821, 0.2
    %v950 = vmul.f32 %v822, 0.2
    %v951 = vmul.f32 %v823, 0.2
    %v952 = vmul.f32 %v824, 0.2
    %v953 = vmul.f32 %v825, 0.2
    %v954 = vmul.f32 %v826, 0.2
    %v955 = vsel %vm827, %v763, %v891
    %v956 = vsel %vm828, %v764, %v892
    %v957 = vsel %vm829, %v765, %v893
    %v958 = vsel %vm830, %v766, %v894
    %v959 = vsel %vm831, %v767, %v895
    %v960 = vsel %vm832, %v768, %v896
    %v961 = vsel %vm833, %v769, %v897
    %v962 = vsel %vm834, %v770, %v898
    %v963 = vsel %vm835, %v771, %v899
    %v964 = vsel %vm836, %v772, %v900
    %v965 = vsel %vm837, %v773, %v901
    %v966 = vsel %vm838, %v774, %v902
    %v967 = vsel %vm839, %v775, %v903
    %v968 = vsel %vm840, %v776, %v904
    %v969 = vsel %vm841, %v777, %v905
    %v970 = vsel %vm842, %v778, %v906
    %v971 = vsel %vm843, %v779, %v907
    %v972 = vsel %vm844, %v780, %v908
    %v973 = vsel %vm845, %v781, %v909
    %v974 = vsel %vm846, %v782, %v910
    %v975 = vsel %vm847, %v783, %v911
    %v976 = vsel %vm848, %v784, %v912
    %v977 = vsel %vm849, %v785, %v913
    %v978 = vsel %vm850, %v786, %v914
    %v979 = vsel %vm851, %v787, %v915
    %v980 = vsel %vm852, %v788, %v916
    %v981 = vsel %vm853, %v789, %v917
    %v982 = vsel %vm854, %v790, %v918
    %v983 = vsel %vm855, %v791, %v919
    %v984 = vsel %vm856, %v792, %v920
    %v985 = vsel %vm857, %v793, %v921
    %v986 = vsel %vm858, %v794, %v922
    %v987 = vsel %vm859, %v795, %v923
    %v988 = vsel %vm860, %v796, %v924
    %v989 = vsel %vm861, %v797, %v925
    %v990 = vsel %vm862, %v798, %v926
    %v991 = vsel %vm863, %v799, %v927
    %v992 = vsel %vm864, %v800, %v928
    %v993 = vsel %vm865, %v801, %v929
    %v994 = vsel %vm866, %v802, %v930
    %v995 = vsel %vm867, %v803, %v931
    %v996 = vsel %vm868, %v804, %v932
    %v997 = vsel %vm869, %v805, %v933
    %v998 = vsel %vm870, %v806, %v934
    %v999 = vsel %vm871, %v807, %v935
    %v1000 = vsel %vm872, %v808, %v936
    %v1001 = vsel %vm873, %v809, %v937
    %v1002 = vsel %vm874, %v810, %v938
    %v1003 = vsel %vm875, %v811, %v939
    %v1004 = vsel %vm876, %v812, %v940
    %v1005 = vsel %vm877, %v813, %v941
    %v1006 = vsel %vm878, %v814, %v942
    %v1007 = vsel %vm879, %v815, %v943
    %v1008 = vsel %vm880, %v816, %v944
    %v1009 = vsel %vm881, %v817, %v945
    %v1010 = vsel %vm882, %v818, %v946
    %v1011 = vsel %vm883, %v819, %v947
    %v1012 = vsel %vm884, %v820, %v948
    %v1013 = vsel %vm885, %v821, %v949
    %v1014 = vsel %vm886, %v822, %v950
    %v1015 = vsel %vm887, %v823, %v951
    %v1016 = vsel %vm888, %v824, %v952
    %v1017 = vsel %vm889, %v825, %v953
    %v1018 = vsel %vm890, %v826, %v954
    %v1019 = vpack.c.bf16 %v955, %v955
    %v1020 = vpack.c.bf16 %v956, %v956
    %v1021 = vpack.c.bf16 %v957, %v957
    %v1022 = vpack.c.bf16 %v958, %v958
    %v1023 = vpack.c.bf16 %v959, %v959
    %v1024 = vpack.c.bf16 %v960, %v960
    %v1025 = vpack.c.bf16 %v961, %v961
    %v1026 = vpack.c.bf16 %v962, %v962
    %v1027 = vpack.c.bf16 %v963, %v963
    %v1028 = vpack.c.bf16 %v964, %v964
    %v1029 = vpack.c.bf16 %v965, %v965
    %v1030 = vpack.c.bf16 %v966, %v966
    %v1031 = vpack.c.bf16 %v967, %v967
    %v1032 = vpack.c.bf16 %v968, %v968
    %v1033 = vpack.c.bf16 %v969, %v969
    %v1034 = vpack.c.bf16 %v970, %v970
    %v1035 = vpack.c.bf16 %v971, %v971
    %v1036 = vpack.c.bf16 %v972, %v972
    %v1037 = vpack.c.bf16 %v973, %v973
    %v1038 = vpack.c.bf16 %v974, %v974
    %v1039 = vpack.c.bf16 %v975, %v975
    %v1040 = vpack.c.bf16 %v976, %v976
    %v1041 = vpack.c.bf16 %v977, %v977
    %v1042 = vpack.c.bf16 %v978, %v978
    %v1043 = vpack.c.bf16 %v979, %v979
    %v1044 = vpack.c.bf16 %v980, %v980
    %v1045 = vpack.c.bf16 %v981, %v981
    %v1046 = vpack.c.bf16 %v982, %v982
    %v1047 = vpack.c.bf16 %v983, %v983
    %v1048 = vpack.c.bf16 %v984, %v984
    %v1049 = vpack.c.bf16 %v985, %v985
    %v1050 = vpack.c.bf16 %v986, %v986
    %v1051 = vpack.c.bf16 %v987, %v987
    %v1052 = vpack.c.bf16 %v988, %v988
    %v1053 = vpack.c.bf16 %v989, %v989
    %v1054 = vpack.c.bf16 %v990, %v990
    %v1055 = vpack.c.bf16 %v991, %v991
    %v1056 = vpack.c.bf16 %v992, %v992
    %v1057 = vpack.c.bf16 %v993, %v993
    %v1058 = vpack.c.bf16 %v994, %v994
    %v1059 = vpack.c.bf16 %v995, %v995
    %v1060 = vpack.c.bf16 %v996, %v996
    %v1061 = vpack.c.bf16 %v997, %v997
    %v1062 = vpack.c.bf16 %v998, %v998
    %v1063 = vpack.c.bf16 %v999, %v999
    %v1064 = vpack.c.bf16 %v1000, %v1000
    %v1065 = vpack.c.bf16 %v1001, %v1001
    %v1066 = vpack.c.bf16 %v1002, %v1002
    %v1067 = vpack.c.bf16 %v1003, %v1003
    %v1068 = vpack.c.bf16 %v1004, %v1004
    %v1069 = vpack.c.bf16 %v1005, %v1005
    %v1070 = vpack.c.bf16 %v1006, %v1006
    %v1071 = vpack.c.bf16 %v1007, %v1007
    %v1072 = vpack.c.bf16 %v1008, %v1008
    %v1073 = vpack.c.bf16 %v1009, %v1009
    %v1074 = vpack.c.bf16 %v1010, %v1010
    %v1075 = vpack.c.bf16 %v1011, %v1011
    %v1076 = vpack.c.bf16 %v1012, %v1012
    %v1077 = vpack.c.bf16 %v1013, %v1013
    %v1078 = vpack.c.bf16 %v1014, %v1014
    %v1079 = vpack.c.bf16 %v1015, %v1015
    %v1080 = vpack.c.bf16 %v1016, %v1016
    %v1081 = vpack.c.bf16 %v1017, %v1017
    %v1082 = vpack.c.bf16 %v1018, %v1018
    %1083 = vst [vmem:[%s2] sm:$0xf] %v1019
    %1084 = vst [vmem:[%s2 + $0x4] sm:$0xf] %v1020
    %1085 = vst [vmem:[%s2 + $0x8] sm:$0xf] %v1021
    %1086 = vst [vmem:[%s2 + $0xc] sm:$0xf] %v1022
    %1087 = vst [vmem:[%s2 + $0x10] sm:$0xf] %v1023
    %1088 = vst [vmem:[%s2 + $0x14] sm:$0xf] %v1024
    %1089 = vst [vmem:[%s2 + $0x18] sm:$0xf] %v1025
    %1090 = vst [vmem:[%s2 + $0x1c] sm:$0xf] %v1026
    %1091 = vst [vmem:[%s2 + $0x20] sm:$0xf] %v1027
    %1092 = vst [vmem:[%s2 + $0x24] sm:$0xf] %v1028
    %1093 = vst [vmem:[%s2 + $0x28] sm:$0xf] %v1029
    %1094 = vst [vmem:[%s2 + $0x2c] sm:$0xf] %v1030
    %1095 = vst [vmem:[%s2 + $0x30] sm:$0xf] %v1031
    %1096 = vst [vmem:[%s2 + $0x34] sm:$0xf] %v1032
    %1097 = vst [vmem:[%s2 + $0x38] sm:$0xf] %v1033
    %1098 = vst [vmem:[%s2 + $0x3c] sm:$0xf] %v1034
    %1099 = vst [vmem:[%s2 + $0x40] sm:$0xf] %v1035
    %1100 = vst [vmem:[%s2 + $0x44] sm:$0xf] %v1036
    %1101 = vst [vmem:[%s2 + $0x48] sm:$0xf] %v1037
    %1102 = vst [vmem:[%s2 + $0x4c] sm:$0xf] %v1038
    %1103 = vst [vmem:[%s2 + $0x50] sm:$0xf] %v1039
    %1104 = vst [vmem:[%s2 + $0x54] sm:$0xf] %v1040
    %1105 = vst [vmem:[%s2 + $0x58] sm:$0xf] %v1041
    %1106 = vst [vmem:[%s2 + $0x5c] sm:$0xf] %v1042
    %1107 = vst [vmem:[%s2 + $0x60] sm:$0xf] %v1043
    %1108 = vst [vmem:[%s2 + $0x64] sm:$0xf] %v1044
    %1109 = vst [vmem:[%s2 + $0x68] sm:$0xf] %v1045
    %1110 = vst [vmem:[%s2 + $0x6c] sm:$0xf] %v1046
    %1111 = vst [vmem:[%s2 + $0x70] sm:$0xf] %v1047
    %1112 = vst [vmem:[%s2 + $0x74] sm:$0xf] %v1048
    %1113 = vst [vmem:[%s2 + $0x78] sm:$0xf] %v1049
    %1114 = vst [vmem:[%s2 + $0x7c] sm:$0xf] %v1050
    %1115 = vst [vmem:[%s2 + $0x80] sm:$0xf] %v1051
    %1116 = vst [vmem:[%s2 + $0x84] sm:$0xf] %v1052
    %1117 = vst [vmem:[%s2 + $0x88] sm:$0xf] %v1053
    %1118 = vst [vmem:[%s2 + $0x8c] sm:$0xf] %v1054
    %1119 = vst [vmem:[%s2 + $0x90] sm:$0xf] %v1055
    %1120 = vst [vmem:[%s2 + $0x94] sm:$0xf] %v1056
    %1121 = vst [vmem:[%s2 + $0x98] sm:$0xf] %v1057
    %1122 = vst [vmem:[%s2 + $0x9c] sm:$0xf] %v1058
    %1123 = vst [vmem:[%s2 + $0xa0] sm:$0xf] %v1059
    %1124 = vst [vmem:[%s2 + $0xa4] sm:$0xf] %v1060
    %1125 = vst [vmem:[%s2 + $0xa8] sm:$0xf] %v1061
    %1126 = vst [vmem:[%s2 + $0xac] sm:$0xf] %v1062
    %1127 = vst [vmem:[%s2 + $0xb0] sm:$0xf] %v1063
    %1128 = vst [vmem:[%s2 + $0xb4] sm:$0xf] %v1064
    %1129 = vst [vmem:[%s2 + $0xb8] sm:$0xf] %v1065
    %1130 = vst [vmem:[%s2 + $0xbc] sm:$0xf] %v1066
    %1131 = vst [vmem:[%s2 + $0xc0] sm:$0xf] %v1067
    %1132 = vst [vmem:[%s2 + $0xc4] sm:$0xf] %v1068
    %1133 = vst [vmem:[%s2 + $0xc8] sm:$0xf] %v1069
    %1134 = vst [vmem:[%s2 + $0xcc] sm:$0xf] %v1070
    %1135 = vst [vmem:[%s2 + $0xd0] sm:$0xf] %v1071
    %1136 = vst [vmem:[%s2 + $0xd4] sm:$0xf] %v1072
    %1137 = vst [vmem:[%s2 + $0xd8] sm:$0xf] %v1073
    %1138 = vst [vmem:[%s2 + $0xdc] sm:$0xf] %v1074
    %1139 = vst [vmem:[%s2 + $0xe0] sm:$0xf] %v1075
    %1140 = vst [vmem:[%s2 + $0xe4] sm:$0xf] %v1076
    %1141 = vst [vmem:[%s2 + $0xe8] sm:$0xf] %v1077
    %1142 = vst [vmem:[%s2 + $0xec] sm:$0xf] %v1078
    %1143 = vst [vmem:[%s2 + $0xf0] sm:$0xf] %v1079
    %1144 = vst [vmem:[%s2 + $0xf4] sm:$0xf] %v1080
    %1145 = vst [vmem:[%s2 + $0xf8] sm:$0xf] %v1081
    %1146 = vst [vmem:[%s2 + $0xfc] sm:$0xf] %v1082
  $region17: #{discriminator_forward.3} parent=0 // pred_fallthru
    _
  // Predicated region
  $region18: #{discriminator_forward.3} parent=0 // pred_check
    _
  $region19: #{discriminator_forward.3} parent=0 // pred_check_branch
    %1148 = sbr.rel (0) target = $region21
  $region20: #{discriminator_forward.3} parent=0 // pred_region
    _
  $region21: #{discriminator_forward.3} parent=0 // pred_fallthru
    _
  // Predicated region
  $region22: #{discriminator_forward.3} parent=0 // pred_check
    _
  $region23: #{discriminator_forward.3} parent=0 // pred_check_branch
    %1150 = sbr.rel (0) target = $region25
  $region24: #{discriminator_forward.3} parent=0 // pred_region
    _
  $region25: #{discriminator_forward.3} parent=0 // pred_fallthru
    _

// kernel: discriminator_forward.4
$region0: #{discriminator_forward.4}
  #allocation0 [shape = 'u32[]', space=smem, size = 0x4, offset = 0x4, fixed_abs, tag = 'smem constant byte address 0x4 - core index']
  #allocation1 [shape = 'u32[72,128]{1,0:T(1,128)}', space=vmem, size = 0x9000, scoped, tag = 'internal scratch']
  #allocation2 [shape = 'f32[128,128]{1,0:T(8,128)}', space=vmem, size = 0x10000, scoped, tag = 'scratch operand']
  %s0 = inlined_call_operand.vmem [shape: bf16[128,128], index: 0, kind: input, shape index: {}]
  %s1 = inlined_call_operand.vmem [shape: bf16[128,128], index: 1, kind: input, shape index: {}]
  %s2 = inlined_call_operand.vmem [shape: f32[1,128], index: 2, kind: input, shape index: {}]
  %s3 = inlined_call_operand.vmem [shape: f32[1,128], index: 3, kind: input, shape index: {}]
  %s4 = inlined_call_operand.vmem [shape: bf16[128,128], index: 4, kind: output, shape index: {}]
  %s5 = sld [smem:[#allocation0]]
  $region34: #{discriminator_forward.4} parent=0
    _
  %s7 = ssub.s32 1, %s5
  %s8 = scalar_select 0, %s7, %s5
  // Predicated region
  $region2: #{discriminator_forward.4} parent=0 // pred_check
    _
  $region3: #{discriminator_forward.4} parent=0 // pred_check_branch
    %10 = sbr.rel (0) target = $region5
  $region4: #{discriminator_forward.4} parent=0 // pred_region
    _
  $region5: #{discriminator_forward.4} parent=0 // pred_fallthru
    _
  // Predicated region
  $region6: #{discriminator_forward.4} parent=0 // pred_check
    _
  $region7: #{discriminator_forward.4} parent=0 // pred_check_branch
    %12 = sbr.rel (0) target = $region9
  $region8: #{discriminator_forward.4} parent=0 // pred_region
    _
  $region9: #{discriminator_forward.4} parent=0 // pred_fallthru
    _
  // Predicated region
  $region10: #{discriminator_forward.4} parent=0 // pred_check
    _
  $region11: #{discriminator_forward.4} parent=0 // pred_check_branch
    %14 = sbr.rel (0) target = $region13
  $region12: #{discriminator_forward.4} parent=0 // pred_region
    _
  $region13: #{discriminator_forward.4} parent=0 // pred_fallthru
    _
  // Predicated region
  $region14: #{discriminator_forward.4} parent=0 // pred_check
    _
  $region15: #{discriminator_forward.4} parent=0 // pred_check_branch
    %16 = sbr.rel (0) target = $region17
  $region16: #{discriminator_forward.4} parent=0 // pred_region
    _
  $region17: #{discriminator_forward.4} parent=0 // pred_fallthru
    _
  %p17 = scmp.eq.s32.totalorder 0, 0
  // Predicated region
  $region18: #{discriminator_forward.4} parent=0 // pred_check
    %p18 = pneg %p17
  $region19: #{discriminator_forward.4} parent=0 // pred_check_branch
    %20 = sbr.rel (%p18) target = $region21
  $region20: #{discriminator_forward.4} parent=0 // pred_region
    %21 = vst [vmem:[#allocation2] sm:$0xff] 0.0
    %22 = vst [vmem:[#allocation2 + $0x8] sm:$0xff] 0.0
    %23 = vst [vmem:[#allocation2 + $0x10] sm:$0xff] 0.0
    %24 = vst [vmem:[#allocation2 + $0x18] sm:$0xff] 0.0
    %25 = vst [vmem:[#allocation2 + $0x20] sm:$0xff] 0.0
    %26 = vst [vmem:[#allocation2 + $0x28] sm:$0xff] 0.0
    %27 = vst [vmem:[#allocation2 + $0x30] sm:$0xff] 0.0
    %28 = vst [vmem:[#allocation2 + $0x38] sm:$0xff] 0.0
    %29 = vst [vmem:[#allocation2 + $0x40] sm:$0xff] 0.0
    %30 = vst [vmem:[#allocation2 + $0x48] sm:$0xff] 0.0
    %31 = vst [vmem:[#allocation2 + $0x50] sm:$0xff] 0.0
    %32 = vst [vmem:[#allocation2 + $0x58] sm:$0xff] 0.0
    %33 = vst [vmem:[#allocation2 + $0x60] sm:$0xff] 0.0
    %34 = vst [vmem:[#allocation2 + $0x68] sm:$0xff] 0.0
    %35 = vst [vmem:[#allocation2 + $0x70] sm:$0xff] 0.0
    %36 = vst [vmem:[#allocation2 + $0x78] sm:$0xff] 0.0
  $region21: #{discriminator_forward.4} parent=0 // pred_fallthru
    _
  %v37 = vld [vmem:[#allocation2] sm:$0xff]
  %v38 = vld [vmem:[#allocation2 + $0x8] sm:$0xff]
  %v39 = vld [vmem:[#allocation2 + $0x10] sm:$0xff]
  %v40 = vld [vmem:[#allocation2 + $0x18] sm:$0xff]
  %v41 = vld [vmem:[#allocation2 + $0x20] sm:$0xff]
  %v42 = vld [vmem:[#allocation2 + $0x28] sm:$0xff]
  %v43 = vld [vmem:[#allocation2 + $0x30] sm:$0xff]
  %v44 = vld [vmem:[#allocation2 + $0x38] sm:$0xff]
  %v45 = vld [vmem:[#allocation2 + $0x40] sm:$0xff]
  %v46 = vld [vmem:[#allocation2 + $0x48] sm:$0xff]
  %v47 = vld [vmem:[#allocation2 + $0x50] sm:$0xff]
  %v48 = vld [vmem:[#allocation2 + $0x58] sm:$0xff]
  %v49 = vld [vmem:[#allocation2 + $0x60] sm:$0xff]
  %v50 = vld [vmem:[#allocation2 + $0x68] sm:$0xff]
  %v51 = vld [vmem:[#allocation2 + $0x70] sm:$0xff]
  %v52 = vld [vmem:[#allocation2 + $0x78] sm:$0xff]
  %v53 = vld [vmem:[%s0] sm:$0xf]
  %v54 = vld [vmem:[%s0 + $0x4] sm:$0xf]
  %v55 = vld [vmem:[%s0 + $0x8] sm:$0xf]
  %v56 = vld [vmem:[%s0 + $0xc] sm:$0xf]
  %v57 = vld [vmem:[%s0 + $0x10] sm:$0xf]
  %v58 = vld [vmem:[%s0 + $0x14] sm:$0xf]
  %v59 = vld [vmem:[%s0 + $0x18] sm:$0xf]
  %v60 = vld [vmem:[%s0 + $0x1c] sm:$0xf]
  %v61 = vld [vmem:[%s0 + $0x20] sm:$0xf]
  %v62 = vld [vmem:[%s0 + $0x24] sm:$0xf]
  %v63 = vld [vmem:[%s0 + $0x28] sm:$0xf]
  %v64 = vld [vmem:[%s0 + $0x2c] sm:$0xf]
  %v65 = vld [vmem:[%s0 + $0x30] sm:$0xf]
  %v66 = vld [vmem:[%s0 + $0x34] sm:$0xf]
  %v67 = vld [vmem:[%s0 + $0x38] sm:$0xf]
  %v68 = vld [vmem:[%s0 + $0x3c] sm:$0xf]
  %v69 = vld [vmem:[%s1] sm:$0xf]
  %v70 = vld [vmem:[%s1 + $0x4] sm:$0xf]
  %v71 = vld [vmem:[%s1 + $0x8] sm:$0xf]
  %v72 = vld [vmem:[%s1 + $0xc] sm:$0xf]
  %v73 = vld [vmem:[%s1 + $0x10] sm:$0xf]
  %v74 = vld [vmem:[%s1 + $0x14] sm:$0xf]
  %v75 = vld [vmem:[%s1 + $0x18] sm:$0xf]
  %v76 = vld [vmem:[%s1 + $0x1c] sm:$0xf]
  %v77 = vld [vmem:[%s1 + $0x20] sm:$0xf]
  %v78 = vld [vmem:[%s1 + $0x24] sm:$0xf]
  %v79 = vld [vmem:[%s1 + $0x28] sm:$0xf]
  %v80 = vld [vmem:[%s1 + $0x2c] sm:$0xf]
  %v81 = vld [vmem:[%s1 + $0x30] sm:$0xf]
  %v82 = vld [vmem:[%s1 + $0x34] sm:$0xf]
  %v83 = vld [vmem:[%s1 + $0x38] sm:$0xf]
  %v84 = vld [vmem:[%s1 + $0x3c] sm:$0xf]
  %v101 = vunpack.c.l.b16 %v53
  %v102 = vunpack.c.l.b16 %v54
  %v103 = vunpack.c.l.b16 %v55
  %v104 = vunpack.c.l.b16 %v56
  %v105 = vunpack.c.l.b16 %v57
  %v106 = vunpack.c.l.b16 %v58
  %v107 = vunpack.c.l.b16 %v59
  %v108 = vunpack.c.l.b16 %v60
  %v109 = vunpack.c.l.b16 %v61
  %v110 = vunpack.c.l.b16 %v62
  %v111 = vunpack.c.l.b16 %v63
  %v112 = vunpack.c.l.b16 %v64
  %v113 = vunpack.c.l.b16 %v65
  %v114 = vunpack.c.l.b16 %v66
  %v115 = vunpack.c.l.b16 %v67
  %v116 = vunpack.c.l.b16 %v68
  %v117 = vpack.c.b16 %v102, %v101
  %v118 = vpack.c.b16 %v104, %v103
  %v119 = vpack.c.b16 %v106, %v105
  %v120 = vpack.c.b16 %v108, %v107
  %v121 = vpack.c.b16 %v110, %v109
  %v122 = vpack.c.b16 %v112, %v111
  %v123 = vpack.c.b16 %v114, %v113
  %v124 = vpack.c.b16 %v116, %v115
  %v149 = vunpack.c.l.b16 %v69
  %v150 = vunpack.c.l.b16 %v70
  %v151 = vunpack.c.l.b16 %v71
  %v152 = vunpack.c.l.b16 %v72
  %v153 = vunpack.c.l.b16 %v73
  %v154 = vunpack.c.l.b16 %v74
  %v155 = vunpack.c.l.b16 %v75
  %v156 = vunpack.c.l.b16 %v76
  %v157 = vunpack.c.l.b16 %v77
  %v158 = vunpack.c.l.b16 %v78
  %v159 = vunpack.c.l.b16 %v79
  %v160 = vunpack.c.l.b16 %v80
  %v161 = vunpack.c.l.b16 %v81
  %v162 = vunpack.c.l.b16 %v82
  %v163 = vunpack.c.l.b16 %v83
  %v164 = vunpack.c.l.b16 %v84
  %v165 = vpack.c.b16 %v150, %v149
  %v166 = vpack.c.b16 %v152, %v151
  %v167 = vpack.c.b16 %v154, %v153
  %v168 = vpack.c.b16 %v156, %v155
  %v169 = vpack.c.b16 %v158, %v157
  %v170 = vpack.c.b16 %v160, %v159
  %v171 = vpack.c.b16 %v162, %v161
  %v172 = vpack.c.b16 %v164, %v163
  %181 = vmatpush.bf16.msra.mxu0 %v172
  %182 = vmatpush.bf16.msra.mxu0 %v171
  %183 = vmatpush.bf16.msra.mxu0 %v170
  %184 = vmatpush.bf16.msra.mxu0 %v169
  %185 = vmatpush.bf16.msra.mxu0 %v168
  %186 = vmatpush.bf16.msra.mxu0 %v167
  %187 = vmatpush.bf16.msra.mxu0 %v166
  %188 = vmatpush.bf16.msra.mxu0 %v165
  %189 = vmatmul.bf16.gmra.mxu0 %v117
  %v190 = vpop.f32.mrf.mxu0
  %v191 = vadd.f32 0.0, %v190
  %v192 = vpop.f32.mrf.mxu0
  %v193 = vadd.f32 0.0, %v192
  %194 = vmatmul.bf16.gmra.mxu0 %v118
  %v195 = vpop.f32.mrf.mxu0
  %v196 = vadd.f32 0.0, %v195
  %v197 = vpop.f32.mrf.mxu0
  %v198 = vadd.f32 0.0, %v197
  %199 = vmatmul.bf16.gmra.mxu0 %v119
  %v200 = vpop.f32.mrf.mxu0
  %v201 = vadd.f32 0.0, %v200
  %v202 = vpop.f32.mrf.mxu0
  %v203 = vadd.f32 0.0, %v202
  %204 = vmatmul.bf16.gmra.mxu0 %v120
  %v205 = vpop.f32.mrf.mxu0
  %v206 = vadd.f32 0.0, %v205
  %v207 = vpop.f32.mrf.mxu0
  %v208 = vadd.f32 0.0, %v207
  %209 = vmatmul.bf16.gmra.mxu0 %v121
  %v210 = vpop.f32.mrf.mxu0
  %v211 = vadd.f32 0.0, %v210
  %v212 = vpop.f32.mrf.mxu0
  %v213 = vadd.f32 0.0, %v212
  %214 = vmatmul.bf16.gmra.mxu0 %v122
  %v215 = vpop.f32.mrf.mxu0
  %v216 = vadd.f32 0.0, %v215
  %v217 = vpop.f32.mrf.mxu0
  %v218 = vadd.f32 0.0, %v217
  %219 = vmatmul.bf16.gmra.mxu0 %v123
  %v220 = vpop.f32.mrf.mxu0
  %v221 = vadd.f32 0.0, %v220
  %v222 = vpop.f32.mrf.mxu0
  %v223 = vadd.f32 0.0, %v222
  %224 = vmatmul.bf16.gmra.mxu0 %v124
  %v225 = vpop.f32.mrf.mxu0
  %v226 = vadd.f32 0.0, %v225
  %v227 = vpop.f32.mrf.mxu0
  %v228 = vadd.f32 0.0, %v227
  %229 = vdwg.mxu0
  %v230 = vadd.f32 %v37, %v191
  %v231 = vadd.f32 %v38, %v193
  %v232 = vadd.f32 %v39, %v196
  %v233 = vadd.f32 %v40, %v198
  %v234 = vadd.f32 %v41, %v201
  %v235 = vadd.f32 %v42, %v203
  %v236 = vadd.f32 %v43, %v206
  %v237 = vadd.f32 %v44, %v208
  %v238 = vadd.f32 %v45, %v211
  %v239 = vadd.f32 %v46, %v213
  %v240 = vadd.f32 %v47, %v216
  %v241 = vadd.f32 %v48, %v218
  %v242 = vadd.f32 %v49, %v221
  %v243 = vadd.f32 %v50, %v223
  %v244 = vadd.f32 %v51, %v226
  %v245 = vadd.f32 %v52, %v228
  %246 = vst [vmem:[#allocation2] sm:$0xff] %v230
  %247 = vst [vmem:[#allocation2 + $0x8] sm:$0xff] %v231
  %248 = vst [vmem:[#allocation2 + $0x10] sm:$0xff] %v232
  %249 = vst [vmem:[#allocation2 + $0x18] sm:$0xff] %v233
  %250 = vst [vmem:[#allocation2 + $0x20] sm:$0xff] %v234
  %251 = vst [vmem:[#allocation2 + $0x28] sm:$0xff] %v235
  %252 = vst [vmem:[#allocation2 + $0x30] sm:$0xff] %v236
  %253 = vst [vmem:[#allocation2 + $0x38] sm:$0xff] %v237
  %254 = vst [vmem:[#allocation2 + $0x40] sm:$0xff] %v238
  %255 = vst [vmem:[#allocation2 + $0x48] sm:$0xff] %v239
  %256 = vst [vmem:[#allocation2 + $0x50] sm:$0xff] %v240
  %257 = vst [vmem:[#allocation2 + $0x58] sm:$0xff] %v241
  %258 = vst [vmem:[#allocation2 + $0x60] sm:$0xff] %v242
  %259 = vst [vmem:[#allocation2 + $0x68] sm:$0xff] %v243
  %260 = vst [vmem:[#allocation2 + $0x70] sm:$0xff] %v244
  %261 = vst [vmem:[#allocation2 + $0x78] sm:$0xff] %v245
  // Predicated region
  $region22: #{discriminator_forward.4} parent=0 // pred_check
    %p262 = pneg %p17
  $region23: #{discriminator_forward.4} parent=0 // pred_check_branch
    %264 = sbr.rel (%p262) target = $region25
  $region24: #{discriminator_forward.4} parent=0 // pred_region
    %v265 = vld [vmem:[#allocation2] sm:$0xff]
    %v266 = vld [vmem:[#allocation2 + $0x8] sm:$0xff]
    %v267 = vld [vmem:[#allocation2 + $0x10] sm:$0xff]
    %v268 = vld [vmem:[#allocation2 + $0x18] sm:$0xff]
    %v269 = vld [vmem:[#allocation2 + $0x20] sm:$0xff]
    %v270 = vld [vmem:[#allocation2 + $0x28] sm:$0xff]
    %v271 = vld [vmem:[#allocation2 + $0x30] sm:$0xff]
    %v272 = vld [vmem:[#allocation2 + $0x38] sm:$0xff]
    %v273 = vld [vmem:[#allocation2 + $0x40] sm:$0xff]
    %v274 = vld [vmem:[#allocation2 + $0x48] sm:$0xff]
    %v275 = vld [vmem:[#allocation2 + $0x50] sm:$0xff]
    %v276 = vld [vmem:[#allocation2 + $0x58] sm:$0xff]
    %v277 = vld [vmem:[#allocation2 + $0x60] sm:$0xff]
    %v278 = vld [vmem:[#allocation2 + $0x68] sm:$0xff]
    %v279 = vld [vmem:[#allocation2 + $0x70] sm:$0xff]
    %v280 = vld [vmem:[#allocation2 + $0x78] sm:$0xff]
    %v281 = vadd.f32 %v265, %v266
    %v282 = vadd.f32 %v281, %v267
    %v283 = vadd.f32 %v282, %v268
    %v284 = vadd.f32 %v283, %v269
    %v285 = vadd.f32 %v284, %v270
    %v286 = vadd.f32 %v285, %v271
    %v287 = vadd.f32 %v286, %v272
    %v288 = vadd.f32 %v287, %v273
    %v289 = vadd.f32 %v288, %v274
    %v290 = vadd.f32 %v289, %v275
    %v291 = vadd.f32 %v290, %v276
    %v292 = vadd.f32 %v291, %v277
    %v293 = vadd.f32 %v292, %v278
    %v294 = vadd.f32 %v293, %v279
    %v295 = vadd.f32 %v294, %v280
    %v296 = vrot.slane %v295, 4
    %v297 = vadd.f32 %v295, %v296
    %v298 = vrot.slane %v297, 2
    %v299 = vadd.f32 %v297, %v298
    %v300 = vrot.slane %v299, 1
    %v301 = vadd.f32 %v299, %v300
    %v302 = vmul.f32 %v301, 0.0078125
    %v303 = vsub.f32 %v265, %v302
    %v304 = vsub.f32 %v266, %v302
    %v305 = vsub.f32 %v267, %v302
    %v306 = vsub.f32 %v268, %v302
    %v307 = vsub.f32 %v269, %v302
    %v308 = vsub.f32 %v270, %v302
    %v309 = vsub.f32 %v271, %v302
    %v310 = vsub.f32 %v272, %v302
    %v311 = vsub.f32 %v273, %v302
    %v312 = vsub.f32 %v274, %v302
    %v313 = vsub.f32 %v275, %v302
    %v314 = vsub.f32 %v276, %v302
    %v315 = vsub.f32 %v277, %v302
    %v316 = vsub.f32 %v278, %v302
    %v317 = vsub.f32 %v279, %v302
    %v318 = vsub.f32 %v280, %v302
    %v319 = vmul.f32 %v303, %v303
    %v320 = vmul.f32 %v304, %v304
    %v321 = vmul.f32 %v305, %v305
    %v322 = vmul.f32 %v306, %v306
    %v323 = vmul.f32 %v307, %v307
    %v324 = vmul.f32 %v308, %v308
    %v325 = vmul.f32 %v309, %v309
    %v326 = vmul.f32 %v310, %v310
    %v327 = vmul.f32 %v311, %v311
    %v328 = vmul.f32 %v312, %v312
    %v329 = vmul.f32 %v313, %v313
    %v330 = vmul.f32 %v314, %v314
    %v331 = vmul.f32 %v315, %v315
    %v332 = vmul.f32 %v316, %v316
    %v333 = vmul.f32 %v317, %v317
    %v334 = vmul.f32 %v318, %v318
    %v335 = vadd.f32 %v319, %v320
    %v336 = vadd.f32 %v335, %v321
    %v337 = vadd.f32 %v336, %v322
    %v338 = vadd.f32 %v337, %v323
    %v339 = vadd.f32 %v338, %v324
    %v340 = vadd.f32 %v339, %v325
    %v341 = vadd.f32 %v340, %v326
    %v342 = vadd.f32 %v341, %v327
    %v343 = vadd.f32 %v342, %v328
    %v344 = vadd.f32 %v343, %v329
    %v345 = vadd.f32 %v344, %v330
    %v346 = vadd.f32 %v345, %v331
    %v347 = vadd.f32 %v346, %v332
    %v348 = vadd.f32 %v347, %v333
    %v349 = vadd.f32 %v348, %v334
    %v350 = vrot.slane %v349, 4
    %v351 = vadd.f32 %v349, %v350
    %v352 = vrot.slane %v351, 2
    %v353 = vadd.f32 %v351, %v352
    %v354 = vrot.slane %v353, 1
    %v355 = vadd.f32 %v353, %v354
    %v356 = vmul.f32 %v355, 0.0078125
    %v357 = vmax.f32 %v356, 0.0
    %v358 = vld [vmem:[%s2] sm:$0x1]
    %v359 = vadd.f32 %v357, 1e-05
    %v360 = vrsqrt.pop %v359
    %v361 = vmul.f32 %v360, %v359
    %v362 = vmul.f32 %v361, %v360
    %v363 = vmul.f32 0.5, %v362
    %v364 = vsub.f32 1.5, %v363
    %v365 = vmul.f32 %v360, %v364
    %vm366 = vweird.f32 %v359
    %vm367 = vweird.f32 %v360
    %vm368 = vmor %vm366, %vm367
    %v369 = vsel %vm368, %v360, %v365
    %v370 = vmul.f32 %v358, %v369
    %v371 = vld [vmem:[%s3] sm:$0x1]
    %v372 = vmul.f32 %v302, %v370
    %v373 = vsub.f32 %v371, %v372
    %v375 = vperm.slane %v370, 0
    %v377 = vmul.f32 %v265, %v375
    %v378 = vmul.f32 %v266, %v375
    %v379 = vmul.f32 %v267, %v375
    %v380 = vmul.f32 %v268, %v375
    %v381 = vmul.f32 %v269, %v375
    %v382 = vmul.f32 %v270, %v375
    %v383 = vmul.f32 %v271, %v375
    %v384 = vmul.f32 %v272, %v375
    %v385 = vmul.f32 %v273, %v375
    %v386 = vmul.f32 %v274, %v375
    %v387 = vmul.f32 %v275, %v375
    %v388 = vmul.f32 %v276, %v375
    %v389 = vmul.f32 %v277, %v375
    %v390 = vmul.f32 %v278, %v375
    %v391 = vmul.f32 %v279, %v375
    %v392 = vmul.f32 %v280, %v375
    %v394 = vperm.slane %v373, 0
    %v396 = vadd.f32 %v377, %v394
    %v397 = vadd.f32 %v378, %v394
    %v398 = vadd.f32 %v379, %v394
    %v399 = vadd.f32 %v380, %v394
    %v400 = vadd.f32 %v381, %v394
    %v401 = vadd.f32 %v382, %v394
    %v402 = vadd.f32 %v383, %v394
    %v403 = vadd.f32 %v384, %v394
    %v404 = vadd.f32 %v385, %v394
    %v405 = vadd.f32 %v386, %v394
    %v406 = vadd.f32 %v387, %v394
    %v407 = vadd.f32 %v388, %v394
    %v408 = vadd.f32 %v389, %v394
    %v409 = vadd.f32 %v390, %v394
    %v410 = vadd.f32 %v391, %v394
    %v411 = vadd.f32 %v392, %v394
    %vm412 = vcmp.ge.f32.partialorder %v396, 0.0
    %vm413 = vcmp.ge.f32.partialorder %v397, 0.0
    %vm414 = vcmp.ge.f32.partialorder %v398, 0.0
    %vm415 = vcmp.ge.f32.partialorder %v399, 0.0
    %vm416 = vcmp.ge.f32.partialorder %v400, 0.0
    %vm417 = vcmp.ge.f32.partialorder %v401, 0.0
    %vm418 = vcmp.ge.f32.partialorder %v402, 0.0
    %vm419 = vcmp.ge.f32.partialorder %v403, 0.0
    %vm420 = vcmp.ge.f32.partialorder %v404, 0.0
    %vm421 = vcmp.ge.f32.partialorder %v405, 0.0
    %vm422 = vcmp.ge.f32.partialorder %v406, 0.0
    %vm423 = vcmp.ge.f32.partialorder %v407, 0.0
    %vm424 = vcmp.ge.f32.partialorder %v408, 0.0
    %vm425 = vcmp.ge.f32.partialorder %v409, 0.0
    %vm426 = vcmp.ge.f32.partialorder %v410, 0.0
    %vm427 = vcmp.ge.f32.partialorder %v411, 0.0
    %v428 = vmul.f32 %v396, 0.2
    %v429 = vmul.f32 %v397, 0.2
    %v430 = vmul.f32 %v398, 0.2
    %v431 = vmul.f32 %v399, 0.2
    %v432 = vmul.f32 %v400, 0.2
    %v433 = vmul.f32 %v401, 0.2
    %v434 = vmul.f32 %v402, 0.2
    %v435 = vmul.f32 %v403, 0.2
    %v436 = vmul.f32 %v404, 0.2
    %v437 = vmul.f32 %v405, 0.2
    %v438 = vmul.f32 %v406, 0.2
    %v439 = vmul.f32 %v407, 0.2
    %v440 = vmul.f32 %v408, 0.2
    %v441 = vmul.f32 %v409, 0.2
    %v442 = vmul.f32 %v410, 0.2
    %v443 = vmul.f32 %v411, 0.2
    %v444 = vsel %vm412, %v396, %v428
    %v445 = vsel %vm413, %v397, %v429
    %v446 = vsel %vm414, %v398, %v430
    %v447 = vsel %vm415, %v399, %v431
    %v448 = vsel %vm416, %v400, %v432
    %v449 = vsel %vm417, %v401, %v433
    %v450 = vsel %vm418, %v402, %v434
    %v451 = vsel %vm419, %v403, %v435
    %v452 = vsel %vm420, %v404, %v436
    %v453 = vsel %vm421, %v405, %v437
    %v454 = vsel %vm422, %v406, %v438
    %v455 = vsel %vm423, %v407, %v439
    %v456 = vsel %vm424, %v408, %v440
    %v457 = vsel %vm425, %v409, %v441
    %v458 = vsel %vm426, %v410, %v442
    %v459 = vsel %vm427, %v411, %v443
    %v460 = vpack.c.bf16 %v444, %v444
    %v461 = vpack.c.bf16 %v445, %v445
    %v462 = vpack.c.bf16 %v446, %v446
    %v463 = vpack.c.bf16 %v447, %v447
    %v464 = vpack.c.bf16 %v448, %v448
    %v465 = vpack.c.bf16 %v449, %v449
    %v466 = vpack.c.bf16 %v450, %v450
    %v467 = vpack.c.bf16 %v451, %v451
    %v468 = vpack.c.bf16 %v452, %v452
    %v469 = vpack.c.bf16 %v453, %v453
    %v470 = vpack.c.bf16 %v454, %v454
    %v471 = vpack.c.bf16 %v455, %v455
    %v472 = vpack.c.bf16 %v456, %v456
    %v473 = vpack.c.bf16 %v457, %v457
    %v474 = vpack.c.bf16 %v458, %v458
    %v475 = vpack.c.bf16 %v459, %v459
    %476 = vst [vmem:[%s4] sm:$0xf] %v460
    %477 = vst [vmem:[%s4 + $0x4] sm:$0xf] %v461
    %478 = vst [vmem:[%s4 + $0x8] sm:$0xf] %v462
    %479 = vst [vmem:[%s4 + $0xc] sm:$0xf] %v463
    %480 = vst [vmem:[%s4 + $0x10] sm:$0xf] %v464
    %481 = vst [vmem:[%s4 + $0x14] sm:$0xf] %v465
    %482 = vst [vmem:[%s4 + $0x18] sm:$0xf] %v466
    %483 = vst [vmem:[%s4 + $0x1c] sm:$0xf] %v467
    %484 = vst [vmem:[%s4 + $0x20] sm:$0xf] %v468
    %485 = vst [vmem:[%s4 + $0x24] sm:$0xf] %v469
    %486 = vst [vmem:[%s4 + $0x28] sm:$0xf] %v470
    %487 = vst [vmem:[%s4 + $0x2c] sm:$0xf] %v471
    %488 = vst [vmem:[%s4 + $0x30] sm:$0xf] %v472
    %489 = vst [vmem:[%s4 + $0x34] sm:$0xf] %v473
    %490 = vst [vmem:[%s4 + $0x38] sm:$0xf] %v474
    %491 = vst [vmem:[%s4 + $0x3c] sm:$0xf] %v475
  $region25: #{discriminator_forward.4} parent=0 // pred_fallthru
    _
  // Predicated region
  $region26: #{discriminator_forward.4} parent=0 // pred_check
    _
  $region27: #{discriminator_forward.4} parent=0 // pred_check_branch
    %493 = sbr.rel (0) target = $region29
  $region28: #{discriminator_forward.4} parent=0 // pred_region
    _
  $region29: #{discriminator_forward.4} parent=0 // pred_fallthru
    _
  // Predicated region
  $region30: #{discriminator_forward.4} parent=0 // pred_check
    _
  $region31: #{discriminator_forward.4} parent=0 // pred_check_branch
    %495 = sbr.rel (0) target = $region33
  $region32: #{discriminator_forward.4} parent=0 // pred_region
    _
  $region33: #{discriminator_forward.4} parent=0 // pred_fallthru
    _

// kernel: discriminator_forward.5
$region0: #{discriminator_forward.5}
  #allocation0 [shape = 'u32[]', space=smem, size = 0x4, offset = 0x4, fixed_abs, tag = 'smem constant byte address 0x4 - core index']
  #allocation1 [shape = 'u32[72,128]{1,0:T(1,128)}', space=vmem, size = 0x9000, scoped, tag = 'internal scratch']
  #allocation2 [shape = 'f32[64,128]{1,0:T(8,128)}', space=vmem, size = 0x8000, scoped, tag = 'scratch operand']
  %s0 = inlined_call_operand.vmem [shape: bf16[64,256], index: 0, kind: input, shape index: {}]
  %s1 = inlined_call_operand.vmem [shape: bf16[256,128], index: 1, kind: input, shape index: {}]
  %s2 = inlined_call_operand.vmem [shape: f32[64,128], index: 2, kind: output, shape index: {}]
  %s3 = sld [smem:[#allocation0]]
  $region26: #{discriminator_forward.5} parent=0
    _
  %s5 = ssub.s32 1, %s3
  %s6 = scalar_select 0, %s5, %s3
  // Predicated region
  $region2: #{discriminator_forward.5} parent=0 // pred_check
    _
  $region3: #{discriminator_forward.5} parent=0 // pred_check_branch
    %8 = sbr.rel (0) target = $region5
  $region4: #{discriminator_forward.5} parent=0 // pred_region
    _
  $region5: #{discriminator_forward.5} parent=0 // pred_fallthru
    _
  // Predicated region
  $region6: #{discriminator_forward.5} parent=0 // pred_check
    _
  $region7: #{discriminator_forward.5} parent=0 // pred_check_branch
    %10 = sbr.rel (0) target = $region9
  $region8: #{discriminator_forward.5} parent=0 // pred_region
    _
  $region9: #{discriminator_forward.5} parent=0 // pred_fallthru
    _
  %p11 = scmp.eq.s32.totalorder 0, 0
  // Predicated region
  $region10: #{discriminator_forward.5} parent=0 // pred_check
    %p12 = pneg %p11
  $region11: #{discriminator_forward.5} parent=0 // pred_check_branch
    %14 = sbr.rel (%p12) target = $region13
  $region12: #{discriminator_forward.5} parent=0 // pred_region
    %15 = vst [vmem:[#allocation2] sm:$0xff] 0.0
    %16 = vst [vmem:[#allocation2 + $0x8] sm:$0xff] 0.0
    %17 = vst [vmem:[#allocation2 + $0x10] sm:$0xff] 0.0
    %18 = vst [vmem:[#allocation2 + $0x18] sm:$0xff] 0.0
    %19 = vst [vmem:[#allocation2 + $0x20] sm:$0xff] 0.0
    %20 = vst [vmem:[#allocation2 + $0x28] sm:$0xff] 0.0
    %21 = vst [vmem:[#allocation2 + $0x30] sm:$0xff] 0.0
    %22 = vst [vmem:[#allocation2 + $0x38] sm:$0xff] 0.0
  $region13: #{discriminator_forward.5} parent=0 // pred_fallthru
    _
  %v23 = vld [vmem:[#allocation2] sm:$0xff]
  %v24 = vld [vmem:[#allocation2 + $0x8] sm:$0xff]
  %v25 = vld [vmem:[#allocation2 + $0x10] sm:$0xff]
  %v26 = vld [vmem:[#allocation2 + $0x18] sm:$0xff]
  %v27 = vld [vmem:[#allocation2 + $0x20] sm:$0xff]
  %v28 = vld [vmem:[#allocation2 + $0x28] sm:$0xff]
  %v29 = vld [vmem:[#allocation2 + $0x30] sm:$0xff]
  %v30 = vld [vmem:[#allocation2 + $0x38] sm:$0xff]
  %v31 = vld [vmem:[%s0] sm:$0xff]
  %v32 = vld [vmem:[%s0 + $0x8] sm:$0xff]
  %v33 = vld [vmem:[%s0 + $0x10] sm:$0xff]
  %v34 = vld [vmem:[%s0 + $0x18] sm:$0xff]
  %v35 = vld [vmem:[%s0 + $0x20] sm:$0xff]
  %v36 = vld [vmem:[%s0 + $0x28] sm:$0xff]
  %v37 = vld [vmem:[%s0 + $0x30] sm:$0xff]
  %v38 = vld [vmem:[%s0 + $0x38] sm:$0xff]
  %v39 = vld [vmem:[%s1] sm:$0xf]
  %v40 = vld [vmem:[%s1 + $0x4] sm:$0xf]
  %v41 = vld [vmem:[%s1 + $0x8] sm:$0xf]
  %v42 = vld [vmem:[%s1 + $0xc] sm:$0xf]
  %v43 = vld [vmem:[%s1 + $0x10] sm:$0xf]
  %v44 = vld [vmem:[%s1 + $0x14] sm:$0xf]
  %v45 = vld [vmem:[%s1 + $0x18] sm:$0xf]
  %v46 = vld [vmem:[%s1 + $0x1c] sm:$0xf]
  %v47 = vld [vmem:[%s1 + $0x20] sm:$0xf]
  %v48 = vld [vmem:[%s1 + $0x24] sm:$0xf]
  %v49 = vld [vmem:[%s1 + $0x28] sm:$0xf]
  %v50 = vld [vmem:[%s1 + $0x2c] sm:$0xf]
  %v51 = vld [vmem:[%s1 + $0x30] sm:$0xf]
  %v52 = vld [vmem:[%s1 + $0x34] sm:$0xf]
  %v53 = vld [vmem:[%s1 + $0x38] sm:$0xf]
  %v54 = vld [vmem:[%s1 + $0x3c] sm:$0xf]
  %v55 = vld [vmem:[%s1 + $0x40] sm:$0xf]
  %v56 = vld [vmem:[%s1 + $0x44] sm:$0xf]
  %v57 = vld [vmem:[%s1 + $0x48] sm:$0xf]
  %v58 = vld [vmem:[%s1 + $0x4c] sm:$0xf]
  %v59 = vld [vmem:[%s1 + $0x50] sm:$0xf]
  %v60 = vld [vmem:[%s1 + $0x54] sm:$0xf]
  %v61 = vld [vmem:[%s1 + $0x58] sm:$0xf]
  %v62 = vld [vmem:[%s1 + $0x5c] sm:$0xf]
  %v63 = vld [vmem:[%s1 + $0x60] sm:$0xf]
  %v64 = vld [vmem:[%s1 + $0x64] sm:$0xf]
  %v65 = vld [vmem:[%s1 + $0x68] sm:$0xf]
  %v66 = vld [vmem:[%s1 + $0x6c] sm:$0xf]
  %v67 = vld [vmem:[%s1 + $0x70] sm:$0xf]
  %v68 = vld [vmem:[%s1 + $0x74] sm:$0xf]
  %v69 = vld [vmem:[%s1 + $0x78] sm:$0xf]
  %v70 = vld [vmem:[%s1 + $0x7c] sm:$0xf]
  %v79 = vunpack.c.l.b16 %v31
  %v80 = vunpack.c.h.b16 %v31
  %v81 = vunpack.c.l.b16 %v32
  %v82 = vunpack.c.h.b16 %v32
  %v83 = vunpack.c.l.b16 %v33
  %v84 = vunpack.c.h.b16 %v33
  %v85 = vunpack.c.l.b16 %v34
  %v86 = vunpack.c.h.b16 %v34
  %v87 = vunpack.c.l.b16 %v35
  %v88 = vunpack.c.h.b16 %v35
  %v89 = vunpack.c.l.b16 %v36
  %v90 = vunpack.c.h.b16 %v36
  %v91 = vunpack.c.l.b16 %v37
  %v92 = vunpack.c.h.b16 %v37
  %v93 = vunpack.c.l.b16 %v38
  %v94 = vunpack.c.h.b16 %v38
  %v95 = vpack.c.b16 %v81, %v79
  %v96 = vpack.c.b16 %v82, %v80
  %v97 = vpack.c.b16 %v85, %v83
  %v98 = vpack.c.b16 %v86, %v84
  %v99 = vpack.c.b16 %v89, %v87
  %v100 = vpack.c.b16 %v90, %v88
  %v101 = vpack.c.b16 %v93, %v91
  %v102 = vpack.c.b16 %v94, %v92
  %v143 = vunpack.c.l.b16 %v39
  %v144 = vunpack.c.l.b16 %v40
  %v145 = vunpack.c.l.b16 %v41
  %v146 = vunpack.c.l.b16 %v42
  %v147 = vunpack.c.l.b16 %v43
  %v148 = vunpack.c.l.b16 %v44
  %v149 = vunpack.c.l.b16 %v45
  %v150 = vunpack.c.l.b16 %v46
  %v151 = vunpack.c.l.b16 %v47
  %v152 = vunpack.c.l.b16 %v48
  %v153 = vunpack.c.l.b16 %v49
  %v154 = vunpack.c.l.b16 %v50
  %v155 = vunpack.c.l.b16 %v51
  %v156 = vunpack.c.l.b16 %v52
  %v157 = vunpack.c.l.b16 %v53
  %v158 = vunpack.c.l.b16 %v54
  %v159 = vunpack.c.l.b16 %v55
  %v160 = vunpack.c.l.b16 %v56
  %v161 = vunpack.c.l.b16 %v57
  %v162 = vunpack.c.l.b16 %v58
  %v163 = vunpack.c.l.b16 %v59
  %v164 = vunpack.c.l.b16 %v60
  %v165 = vunpack.c.l.b16 %v61
  %v166 = vunpack.c.l.b16 %v62
  %v167 = vunpack.c.l.b16 %v63
  %v168 = vunpack.c.l.b16 %v64
  %v169 = vunpack.c.l.b16 %v65
  %v170 = vunpack.c.l.b16 %v66
  %v171 = vunpack.c.l.b16 %v67
  %v172 = vunpack.c.l.b16 %v68
  %v173 = vunpack.c.l.b16 %v69
  %v174 = vunpack.c.l.b16 %v70
  %v175 = vpack.c.b16 %v144, %v143
  %v176 = vpack.c.b16 %v146, %v145
  %v177 = vpack.c.b16 %v148, %v147
  %v178 = vpack.c.b16 %v150, %v149
  %v179 = vpack.c.b16 %v152, %v151
  %v180 = vpack.c.b16 %v154, %v153
  %v181 = vpack.c.b16 %v156, %v155
  %v182 = vpack.c.b16 %v158, %v157
  %v183 = vpack.c.b16 %v160, %v159
  %v184 = vpack.c.b16 %v162, %v161
  %v185 = vpack.c.b16 %v164, %v163
  %v186 = vpack.c.b16 %v166, %v165
  %v187 = vpack.c.b16 %v168, %v167
  %v188 = vpack.c.b16 %v170, %v169
  %v189 = vpack.c.b16 %v172, %v171
  %v190 = vpack.c.b16 %v174, %v173
  %207 = vmatpush.bf16.msra.mxu0 %v182
  %208 = vmatpush.bf16.msra.mxu0 %v181
  %209 = vmatpush.bf16.msra.mxu0 %v180
  %210 = vmatpush.bf16.msra.mxu0 %v179
  %211 = vmatpush.bf16.msra.mxu0 %v178
  %212 = vmatpush.bf16.msra.mxu0 %v177
  %213 = vmatpush.bf16.msra.mxu0 %v176
  %214 = vmatpush.bf16.msra.mxu0 %v175
  %215 = vmatmul.bf16.gmra.mxu0 %v95
  %v216 = vpop.f32.mrf.mxu0
  %v217 = vadd.f32 0.0, %v216
  %v218 = vpop.f32.mrf.mxu0
  %v219 = vadd.f32 0.0, %v218
  %220 = vmatmul.bf16.gmra.mxu0 %v97
  %v221 = vpop.f32.mrf.mxu0
  %v222 = vadd.f32 0.0, %v221
  %v223 = vpop.f32.mrf.mxu0
  %v224 = vadd.f32 0.0, %v223
  %225 = vmatmul.bf16.gmra.mxu0 %v99
  %v226 = vpop.f32.mrf.mxu0
  %v227 = vadd.f32 0.0, %v226
  %v228 = vpop.f32.mrf.mxu0
  %v229 = vadd.f32 0.0, %v228
  %230 = vmatmul.bf16.gmra.mxu0 %v101
  %v231 = vpop.f32.mrf.mxu0
  %v232 = vadd.f32 0.0, %v231
  %v233 = vpop.f32.mrf.mxu0
  %v234 = vadd.f32 0.0, %v233
  %235 = vdwg.mxu0
  %236 = vmatpush.bf16.msra.mxu0 %v190
  %237 = vmatpush.bf16.msra.mxu0 %v189
  %238 = vmatpush.bf16.msra.mxu0 %v188
  %239 = vmatpush.bf16.msra.mxu0 %v187
  %240 = vmatpush.bf16.msra.mxu0 %v186
  %241 = vmatpush.bf16.msra.mxu0 %v185
  %242 = vmatpush.bf16.msra.mxu0 %v184
  %243 = vmatpush.bf16.msra.mxu0 %v183
  %244 = vmatmul.bf16.gmra.mxu0 %v96
  %v245 = vpop.f32.mrf.mxu0
  %v246 = vadd.f32 %v217, %v245
  %v247 = vpop.f32.mrf.mxu0
  %v248 = vadd.f32 %v219, %v247
  %249 = vmatmul.bf16.gmra.mxu0 %v98
  %v250 = vpop.f32.mrf.mxu0
  %v251 = vadd.f32 %v222, %v250
  %v252 = vpop.f32.mrf.mxu0
  %v253 = vadd.f32 %v224, %v252
  %254 = vmatmul.bf16.gmra.mxu0 %v100
  %v255 = vpop.f32.mrf.mxu0
  %v256 = vadd.f32 %v227, %v255
  %v257 = vpop.f32.mrf.mxu0
  %v258 = vadd.f32 %v229, %v257
  %259 = vmatmul.bf16.gmra.mxu0 %v102
  %v260 = vpop.f32.mrf.mxu0
  %v261 = vadd.f32 %v232, %v260
  %v262 = vpop.f32.mrf.mxu0
  %v263 = vadd.f32 %v234, %v262
  %264 = vdwg.mxu0
  %v265 = vadd.f32 %v23, %v246
  %v266 = vadd.f32 %v24, %v248
  %v267 = vadd.f32 %v25, %v251
  %v268 = vadd.f32 %v26, %v253
  %v269 = vadd.f32 %v27, %v256
  %v270 = vadd.f32 %v28, %v258
  %v271 = vadd.f32 %v29, %v261
  %v272 = vadd.f32 %v30, %v263
  %273 = vst [vmem:[#allocation2] sm:$0xff] %v265
  %274 = vst [vmem:[#allocation2 + $0x8] sm:$0xff] %v266
  %275 = vst [vmem:[#allocation2 + $0x10] sm:$0xff] %v267
  %276 = vst [vmem:[#allocation2 + $0x18] sm:$0xff] %v268
  %277 = vst [vmem:[#allocation2 + $0x20] sm:$0xff] %v269
  %278 = vst [vmem:[#allocation2 + $0x28] sm:$0xff] %v270
  %279 = vst [vmem:[#allocation2 + $0x30] sm:$0xff] %v271
  %280 = vst [vmem:[#allocation2 + $0x38] sm:$0xff] %v272
  // Predicated region
  $region14: #{discriminator_forward.5} parent=0 // pred_check
    %p281 = pneg %p11
  $region15: #{discriminator_forward.5} parent=0 // pred_check_branch
    %283 = sbr.rel (%p281) target = $region17
  $region16: #{discriminator_forward.5} parent=0 // pred_region
    %v284 = vld [vmem:[#allocation2] sm:$0xff]
    %v285 = vld [vmem:[#allocation2 + $0x8] sm:$0xff]
    %v286 = vld [vmem:[#allocation2 + $0x10] sm:$0xff]
    %v287 = vld [vmem:[#allocation2 + $0x18] sm:$0xff]
    %v288 = vld [vmem:[#allocation2 + $0x20] sm:$0xff]
    %v289 = vld [vmem:[#allocation2 + $0x28] sm:$0xff]
    %v290 = vld [vmem:[#allocation2 + $0x30] sm:$0xff]
    %v291 = vld [vmem:[#allocation2 + $0x38] sm:$0xff]
    %v292 = vsub.f32 0.0, %v284
    %v293 = vsub.f32 0.0, %v285
    %v294 = vsub.f32 0.0, %v286
    %v295 = vsub.f32 0.0, %v287
    %v296 = vsub.f32 0.0, %v288
    %v297 = vsub.f32 0.0, %v289
    %v298 = vsub.f32 0.0, %v290
    %v299 = vsub.f32 0.0, %v291
    %v300 = vmul.f32 %v292, 1.442695
    %v301 = vpow.pop %v300
    %v302 = vmul.f32 %v293, 1.442695
    %v303 = vpow.pop %v302
    %v304 = vmul.f32 %v294, 1.442695
    %v305 = vpow.pop %v304
    %v306 = vmul.f32 %v295, 1.442695
    %v307 = vpow.pop %v306
    %v308 = vmul.f32 %v296, 1.442695
    %v309 = vpow.pop %v308
    %v310 = vmul.f32 %v297, 1.442695
    %v311 = vpow.pop %v310
    %v312 = vmul.f32 %v298, 1.442695
    %v313 = vpow.pop %v312
    %v314 = vmul.f32 %v299, 1.442695
    %v315 = vpow.pop %v314
    %v316 = vadd.f32 %v301, 1.0
    %v317 = vadd.f32 %v303, 1.0
    %v318 = vadd.f32 %v305, 1.0
    %v319 = vadd.f32 %v307, 1.0
    %v320 = vadd.f32 %v309, 1.0
    %v321 = vadd.f32 %v311, 1.0
    %v322 = vadd.f32 %v313, 1.0
    %v323 = vadd.f32 %v315, 1.0
    %v324 = vrcp.pop %v316
    %v325 = vrcp.pop %v317
    %v326 = vrcp.pop %v318
    %v327 = vrcp.pop %v319
    %v328 = vrcp.pop %v320
    %v329 = vrcp.pop %v321
    %v330 = vrcp.pop %v322
    %v331 = vrcp.pop %v323
    %332 = vst [vmem:[%s2] sm:$0xff] %v324
    %333 = vst [vmem:[%s2 + $0x8] sm:$0xff] %v325
    %334 = vst [vmem:[%s2 + $0x10] sm:$0xff] %v326
    %335 = vst [vmem:[%s2 + $0x18] sm:$0xff] %v327
    %336 = vst [vmem:[%s2 + $0x20] sm:$0xff] %v328
    %337 = vst [vmem:[%s2 + $0x28] sm:$0xff] %v329
    %338 = vst [vmem:[%s2 + $0x30] sm:$0xff] %v330
    %339 = vst [vmem:[%s2 + $0x38] sm:$0xff] %v331
  $region17: #{discriminator_forward.5} parent=0 // pred_fallthru
    _
  // Predicated region
  $region18: #{discriminator_forward.5} parent=0 // pred_check
    _
  $region19: #{discriminator_forward.5} parent=0 // pred_check_branch
    %341 = sbr.rel (0) target = $region21
  $region20: #{discriminator_forward.5} parent=0 // pred_region
    _
  $region21: #{discriminator_forward.5} parent=0 // pred_fallthru
    _
  // Predicated region
  $region22: #{discriminator_forward.5} parent=0 // pred_check
    _
  $region23: #{discriminator_forward.5} parent=0 // pred_check_branch
    %343 = sbr.rel (0) target = $region25
  $region24: #{discriminator_forward.5} parent=0 // pred_region
    _
  $region25: #{discriminator_forward.5} parent=0 // pred_fallthru
    _

</llo_original>
